<compile_context>
chip_gen: v7x
topology: tpu7x:2x2x1
jax: 0.10.0
libtpu: 0.0.40
codegen_flags: <defaults>
</compile_context>

<pallas_src>
import jax
import jax.numpy as jnp
from jax.experimental import pallas as pl
from jax.experimental.pallas import tpu as pltpu


def _sswl_kernel(x_ref, abd_ref, kron_ref, w_ref, b_ref, o_ref):
    """One grid step = one chunk of `bt` graphs, batch folded into the matmul M dimension.

      x_ref    : (bt*N, N*C)    f32   rows = (batch, node u), lanes = (node v, channel c)
      abd_ref  : (bt*N, bt*N)   bf16  blockdiag(A_0..A_{bt-1})          (0/1 -> bf16-exact)
      kron_ref : (bt*N*C, N*C)  bf16  kron(A_b, I_C) stacked along rows (0/1 -> bf16-exact)
      w_ref    : (N*C, 4*N*C)   bf16  packed block-diag weights [W_uL | W_vL | W_m1 | W_m2]
      b_ref    : (1, 4*N*C)     f32   packed biases (tiled per node)
      o_ref    : (bt*N, N*C)    f32   output
    """
    m_rows, nc = x_ref.shape
    bt = kron_ref.shape[0] // nc        # graphs in this grid step
    n = m_rows // bt                    # nodes per graph
    f32 = jnp.float32
    bf16 = jnp.bfloat16

    # Packed (resident) weight views: lane-aligned static slices.
    w_uv = w_ref[:, 0:2 * nc]           # fused uL/vL projection  (N*C, 2*N*C)
    w_m1 = w_ref[:, 2 * nc:3 * nc]      # mlp ReLULin             (N*C, N*C)
    w_m2 = w_ref[:, 3 * nc:4 * nc]      # mlp Conv1x1             (N*C, N*C)

    # Fused ReLULin for the uL and vL branches: ONE bf16 matmul with M = bt*N rows.
    xr = jnp.maximum(x_ref[...], 0.0).astype(bf16)
    h_uv = jnp.dot(xr, w_uv, preferred_element_type=f32) + b_ref[:, 0:2 * nc]   # (bt*N, 2NC) f32
    h_u = h_uv[:, 0:nc]
    h_v = h_uv[:, nc:2 * nc]

    # uL aggregation: blockdiag(A) zeroes cross-batch contributions -> one matmul per step.
    #   u_loc[b*N+u, (v,c)] = sum_w A_b[u, w] * h_u[b*N+w, (v,c)]
    u_loc = jnp.dot(abd_ref[...], h_u.astype(bf16), preferred_element_type=f32)

    # vL aggregation: per graph, h_v[b] @ kron(A_b, I_C) (kron precomputed host-side; no
    # in-kernel mask/iota construction).
    #   v_loc[b*N+u, (v,c)] = sum_w h_v[b*N+u, (w,c)] * A_b[w, v]
    h_vb = h_v.astype(bf16)
    if bt == 1:
        v_loc = jnp.dot(h_vb, kron_ref[...], preferred_element_type=f32)
    else:
        v_loc = jnp.concatenate(
            [jnp.dot(h_vb[b * n:(b + 1) * n, :],
                     kron_ref[b * nc:(b + 1) * nc, :],
                     preferred_element_type=f32)
             for b in range(bt)],
            axis=0)

    # (1 + eps) * after_nn + after_op for both OpLayers (eps = 0), summed.
    agg = h_u + u_loc + h_v + v_loc                         # (bt*N, N*C) f32

    # mlp = ReLULin -> Conv1x1 (no activation in between), plus residual.
    # Bias adds happen exactly once per grid step (no per-batch unrolled loop anymore).
    m = jnp.dot(jnp.maximum(agg, 0.0).astype(bf16), w_m1,
                preferred_element_type=f32) + b_ref[:, 2 * nc:3 * nc]
    m = jnp.dot(m.astype(bf16), w_m2,
                preferred_element_type=f32) + b_ref[:, 3 * nc:4 * nc]

    o_ref[...] = agg + m                                    # full-lane (unmasked) store


def _pack_params(params, n, c):
    """Pack the four (C,C) 1x1-conv weights as block-diagonal kron(I_N, W) matrices, concatenated
    along lanes into one (N*C, 4*N*C) bf16 array (MXU-native, halves the resident weight DMA),
    and the biases tiled per node into one f32 (1, 4*N*C) row."""
    eye_n = jnp.eye(n, dtype=jnp.float32)
    blk = lambda w: jnp.kron(eye_n, w.astype(jnp.float32))                     # (N*C, N*C)
    row = lambda b: jnp.tile(b.reshape(1, c).astype(jnp.float32), (1, n))      # (1, N*C)
    w_packed = jnp.concatenate([blk(params["w_ul"]), blk(params["w_vl"]),
                                blk(params["w_m1"]), blk(params["w_m2"])],
                               axis=1).astype(jnp.bfloat16)
    b_packed = jnp.concatenate([row(params["b_ul"]), row(params["b_vl"]),
                                row(params["b_m1"]), row(params["b_m2"])], axis=1)
    return w_packed, b_packed


def _tensorcores_per_chip():
    """Best-effort TC-per-chip detection; only affects the default grid split (perf, not math)."""
    try:
        kind = jax.devices()[0].device_kind.lower()
    except Exception:
        return 1
    # v7x has 2 TensorCores per chip; v4 / v5p expose a megacore pair. v5e / v6e have 1.
    return 2 if any(t in kind for t in ("v7", "7x", "v4", "v5p")) else 1


def _default_batch_block(batch):
    """One grid step on single-TC chips (max M, no per-step overhead); exactly two 'parallel'
    grid steps on dual-TC chips so both TensorCores get work."""
    if _tensorcores_per_chip() >= 2 and batch >= 2 and batch % 2 == 0:
        return batch // 2
    return batch


def sswl_forward(x_nchw, a, params, *, batch_block=None):
    """x_nchw: (B, C, N, N) float32, a: (B, N, N) float32. Returns (B, C, N, N)."""
    B, C, N, _ = x_nchw.shape
    NC = N * C
    if batch_block is None:
        batch_block = _default_batch_block(B)
    assert B % batch_block == 0
    bt = batch_block
    nsteps = B // bt
    # (8,128) tiling note: block second-to-last dims are bt*N and bt*NC; with N a multiple of 8
    # (or a single grid step) these are sublane-aligned. N=8 in the test below.

    w_packed, b_packed = _pack_params(params, N, C)

    # NCHW -> (B*N, N*C): rows = (batch, node u), lanes = (node v, channel c). Lane-dense.
    x2 = jnp.transpose(x_nchw, (0, 2, 3, 1)).reshape(B * N, NC)

    # blockdiag(A) per batch chunk: (nsteps, bt, N, bt, N) -> (nsteps*bt*N, bt*N). bf16-exact (0/1).
    a_r = a.reshape(nsteps, bt, N, N)
    a_bd = jnp.einsum('sbuv,bc->sbucv', a_r, jnp.eye(bt, dtype=a.dtype))
    a_bd = a_bd.reshape(nsteps * bt * N, bt * N).astype(jnp.bfloat16)

    # kron(A_b, I_C) per graph, stacked along rows: (B*N*C, N*C). bf16-exact (0/1 entries).
    kron = jnp.einsum('buv,cd->bucvd', a, jnp.eye(C, dtype=a.dtype))
    kron = kron.reshape(B * NC, NC).astype(jnp.bfloat16)

    out2 = pl.pallas_call(
        _sswl_kernel,
        out_shape=jax.ShapeDtypeStruct((B * N, NC), jnp.float32),
        grid_spec=pltpu.PrefetchScalarGridSpec(
            num_scalar_prefetch=0,
            grid=(nsteps,),
            in_specs=[
                pl.BlockSpec((bt * N, NC), lambda s: (s, 0)),        # X (batch folded into M)
                pl.BlockSpec((bt * N, bt * N), lambda s: (s, 0)),    # blockdiag(A) for this chunk
                pl.BlockSpec((bt * NC, NC), lambda s: (s, 0)),       # kron(A, I_C), row-stacked
                pl.BlockSpec((NC, 4 * NC), lambda s: (0, 0)),        # packed bf16 weights (resident)
                pl.BlockSpec((1, 4 * NC), lambda s: (0, 0)),         # packed f32 biases   (resident)
            ],
            out_specs=pl.BlockSpec((bt * N, NC), lambda s: (s, 0)),
        ),
        compiler_params=pltpu.CompilerParams(dimension_semantics=("parallel",)),
    )(x2, a_bd, kron, w_packed, b_packed)

    # Back to NCHW.
    return jnp.transpose(out2.reshape(B, N, N, C), (0, 3, 1, 2))


def sswl_reference(x_nchw, a, params):
    """Pure-JAX f32 mirror of the PyTorch forward (NCHW), for correctness checking.
    Kernel weights are stored as (C_in, C_out); torch Conv2d weight[o,i,0,0] == W[i,o]."""
    def relulin(x, w, b):
        xr = jnp.maximum(x, 0.0)
        return jnp.einsum('io,bihw->bohw', w, xr) + b.reshape(1, -1, 1, 1)

    h_u = relulin(x_nchw, params["w_ul"], params["b_ul"])
    h_v = relulin(x_nchw, params["w_vl"], params["b_vl"])
    uL = jnp.einsum('buw,bcwv->bcuv', a, h_u)          # LocalOp('uL'): A @ h
    vL = jnp.einsum('bcuw,bwv->bcuv', h_v, a)          # LocalOp('vL'): h @ A
    agg = (h_u + uL) + (h_v + vL)                      # (1+eps)*h + op, eps=0
    m = relulin(agg, params["w_m1"], params["b_m1"])
    m = jnp.einsum('io,bihw->bohw', params["w_m2"], m) + params["b_m2"].reshape(1, -1, 1, 1)
    return agg + m


def init_params(key, C):
    ks = jax.random.split(key, 8)
    def w(k):
        return 0.1 * jax.random.normal(k, (C, C), jnp.float32)
    def b(k):
        return 0.1 * jax.random.normal(k, (1, C), jnp.float32)
    return {
        "w_ul": w(ks[0]), "b_ul": b(ks[1]),
        "w_vl": w(ks[2]), "b_vl": b(ks[3]),
        "w_m1": w(ks[4]), "b_m1": b(ks[5]),
        "w_m2": w(ks[6]), "b_m2": b(ks[7]),
    }


if __name__ == "__main__":
    B, C, N = 2, 32, 8   # batch, channels, num_nodes  -> X: (B, C, N, N), A: (B, N, N)

    key = jax.random.PRNGKey(0)
    kx, ka, kp = jax.random.split(key, 3)

    x = jax.random.normal(kx, (B, C, N, N), jnp.float32)
    # symmetric 0/1 adjacency with no self loops
    a_raw = (jax.random.uniform(ka, (B, N, N)) < 0.4).astype(jnp.float32)
    a = jnp.maximum(a_raw, jnp.transpose(a_raw, (0, 2, 1)))
    a = a * (1.0 - jnp.eye(N, dtype=jnp.float32)[None])

    params = init_params(kp, C)

    out = jax.block_until_ready(sswl_forward(x, a, params))
    ref = jax.block_until_ready(sswl_reference(x, a, params))

    assert out.shape == (B, C, N, N)
    err = float(jnp.max(jnp.abs(out - ref)))
    ref_mag = float(jnp.max(jnp.abs(ref)))
    # bf16 matmul operands (with f32 accumulation / residuals) -> ~1e-2-scale relative tolerance.
    assert err <= max(5e-2, 3e-2 * ref_mag), f"mismatch vs reference: {err} (ref max {ref_mag})"
    print("KERNEL_OK")
</pallas_src>

<mosaic_0001>
module attributes {stable_mosaic.version = 11 : i64} {
  func.func @_sswl_kernel(%arg0: i32, %arg1: memref<16x256xf32, #tpu.memory_space<vmem>>, %arg2: memref<16x16xbf16, #tpu.memory_space<vmem>>, %arg3: memref<512x256xbf16, #tpu.memory_space<vmem>>, %arg4: memref<256x1024xbf16, #tpu.memory_space<vmem>>, %arg5: memref<1x1024xf32, #tpu.memory_space<vmem>>, %arg6: memref<16x256xf32, #tpu.memory_space<vmem>>) attributes {dimension_semantics = [#tpu.dimension_semantics<parallel>], iteration_bounds = array<i64: 1>, scalar_prefetch = 0 : i64, scratch_operands = 0 : i64, tpu.core_type = #tpu.core_type<tc>, window_params = [{transform_indices = @transform_0, window_bounds = array<i64: 16, 256>}, {transform_indices = @transform_1, window_bounds = array<i64: 16, 16>}, {transform_indices = @transform_2, window_bounds = array<i64: 512, 256>}, {pipeline_mode = #tpu.pipeline_mode<synchronous>, transform_indices = @transform_3, window_bounds = array<i64: 256, 1024>}, {pipeline_mode = #tpu.pipeline_mode<synchronous>, transform_indices = @transform_4, window_bounds = array<i64: 1, 1024>}, {transform_indices = @transform_5, window_bounds = array<i64: 16, 256>}]} {
    %c0 = arith.constant 0 : index
    %c0_0 = arith.constant 0 : index
    %0 = vector.load %arg4[%c0, %c0_0] : memref<256x1024xbf16, #tpu.memory_space<vmem>>, vector<256x512xbf16>
    %c0_1 = arith.constant 0 : index
    %c512 = arith.constant 512 : index
    %1 = vector.load %arg4[%c0_1, %c512] : memref<256x1024xbf16, #tpu.memory_space<vmem>>, vector<256x256xbf16>
    %c0_2 = arith.constant 0 : index
    %c768 = arith.constant 768 : index
    %2 = vector.load %arg4[%c0_2, %c768] : memref<256x1024xbf16, #tpu.memory_space<vmem>>, vector<256x256xbf16>
    %c0_3 = arith.constant 0 : index
    %c0_4 = arith.constant 0 : index
    %3 = vector.load %arg1[%c0_3, %c0_4] : memref<16x256xf32, #tpu.memory_space<vmem>>, vector<16x256xf32>
    %cst = arith.constant 0.000000e+00 : f32
    %4 = vector.broadcast %cst : f32 to vector<16x256xf32>
    %5 = arith.maximumf %3, %4 : vector<16x256xf32>
    %6 = arith.truncf %5 : vector<16x256xf32> to vector<16x256xbf16>
    %cst_5 = arith.constant dense<0.000000e+00> : vector<16x512xf32>
    %7 = tpu.matmul %6, %0, %cst_5 {dimension_numbers = #tpu.dot_dimension_numbers<[1], [0], [0], [1], [0, 0, 1, 1], [], []>} : vector<16x256xbf16>, vector<256x512xbf16>, vector<16x512xf32> -> vector<16x512xf32>
    %c0_6 = arith.constant 0 : index
    %c0_7 = arith.constant 0 : index
    %8 = vector.load %arg5[%c0_6, %c0_7] : memref<1x1024xf32, #tpu.memory_space<vmem>>, vector<1x512xf32>
    %9 = vector.broadcast %8 : vector<1x512xf32> to vector<16x512xf32>
    %10 = arith.addf %7, %9 : vector<16x512xf32>
    %11 = vector.extract_strided_slice %10 {offsets = [0, 0], sizes = [16, 256], strides = [1, 1]} : vector<16x512xf32> to vector<16x256xf32>
    %12 = vector.extract_strided_slice %10 {offsets = [0, 256], sizes = [16, 256], strides = [1, 1]} : vector<16x512xf32> to vector<16x256xf32>
    %c0_8 = arith.constant 0 : index
    %c0_9 = arith.constant 0 : index
    %13 = vector.load %arg2[%c0_8, %c0_9] : memref<16x16xbf16, #tpu.memory_space<vmem>>, vector<16x16xbf16>
    %14 = arith.truncf %11 : vector<16x256xf32> to vector<16x256xbf16>
    %cst_10 = arith.constant dense<0.000000e+00> : vector<16x256xf32>
    %15 = tpu.matmul %13, %14, %cst_10 {dimension_numbers = #tpu.dot_dimension_numbers<[1], [0], [0], [1], [0, 0, 1, 1], [], []>} : vector<16x16xbf16>, vector<16x256xbf16>, vector<16x256xf32> -> vector<16x256xf32>
    %16 = arith.truncf %12 : vector<16x256xf32> to vector<16x256xbf16>
    %17 = vector.extract_strided_slice %16 {offsets = [0, 0], sizes = [8, 256], strides = [1, 1]} : vector<16x256xbf16> to vector<8x256xbf16>
    %c0_11 = arith.constant 0 : index
    %c0_12 = arith.constant 0 : index
    %18 = vector.load %arg3[%c0_11, %c0_12] : memref<512x256xbf16, #tpu.memory_space<vmem>>, vector<256x256xbf16>
    %cst_13 = arith.constant dense<0.000000e+00> : vector<8x256xf32>
    %19 = tpu.matmul %17, %18, %cst_13 {dimension_numbers = #tpu.dot_dimension_numbers<[1], [0], [0], [1], [0, 0, 1, 1], [], []>} : vector<8x256xbf16>, vector<256x256xbf16>, vector<8x256xf32> -> vector<8x256xf32>
    %20 = vector.extract_strided_slice %16 {offsets = [8, 0], sizes = [8, 256], strides = [1, 1]} : vector<16x256xbf16> to vector<8x256xbf16>
    %c256 = arith.constant 256 : index
    %c0_14 = arith.constant 0 : index
    %21 = vector.load %arg3[%c256, %c0_14] : memref<512x256xbf16, #tpu.memory_space<vmem>>, vector<256x256xbf16>
    %cst_15 = arith.constant dense<0.000000e+00> : vector<8x256xf32>
    %22 = tpu.matmul %20, %21, %cst_15 {dimension_numbers = #tpu.dot_dimension_numbers<[1], [0], [0], [1], [0, 0, 1, 1], [], []>} : vector<8x256xbf16>, vector<256x256xbf16>, vector<8x256xf32> -> vector<8x256xf32>
    %23 = tpu.concatenate %19, %22 in 0 : vector<8x256xf32>, vector<8x256xf32> -> vector<16x256xf32>
    %24 = arith.addf %11, %15 : vector<16x256xf32>
    %25 = arith.addf %24, %12 : vector<16x256xf32>
    %26 = arith.addf %25, %23 : vector<16x256xf32>
    %cst_16 = arith.constant 0.000000e+00 : f32
    %27 = vector.broadcast %cst_16 : f32 to vector<16x256xf32>
    %28 = arith.maximumf %26, %27 : vector<16x256xf32>
    %29 = arith.truncf %28 : vector<16x256xf32> to vector<16x256xbf16>
    %cst_17 = arith.constant dense<0.000000e+00> : vector<16x256xf32>
    %30 = tpu.matmul %29, %1, %cst_17 {dimension_numbers = #tpu.dot_dimension_numbers<[1], [0], [0], [1], [0, 0, 1, 1], [], []>} : vector<16x256xbf16>, vector<256x256xbf16>, vector<16x256xf32> -> vector<16x256xf32>
    %c0_18 = arith.constant 0 : index
    %c512_19 = arith.constant 512 : index
    %31 = vector.load %arg5[%c0_18, %c512_19] : memref<1x1024xf32, #tpu.memory_space<vmem>>, vector<1x256xf32>
    %32 = vector.broadcast %31 : vector<1x256xf32> to vector<16x256xf32>
    %33 = arith.addf %30, %32 : vector<16x256xf32>
    %34 = arith.truncf %33 : vector<16x256xf32> to vector<16x256xbf16>
    %cst_20 = arith.constant dense<0.000000e+00> : vector<16x256xf32>
    %35 = tpu.matmul %34, %2, %cst_20 {dimension_numbers = #tpu.dot_dimension_numbers<[1], [0], [0], [1], [0, 0, 1, 1], [], []>} : vector<16x256xbf16>, vector<256x256xbf16>, vector<16x256xf32> -> vector<16x256xf32>
    %c0_21 = arith.constant 0 : index
    %c768_22 = arith.constant 768 : index
    %36 = vector.load %arg5[%c0_21, %c768_22] : memref<1x1024xf32, #tpu.memory_space<vmem>>, vector<1x256xf32>
    %37 = vector.broadcast %36 : vector<1x256xf32> to vector<16x256xf32>
    %38 = arith.addf %35, %37 : vector<16x256xf32>
    %39 = arith.addf %26, %38 : vector<16x256xf32>
    %c0_23 = arith.constant 0 : index
    %c0_24 = arith.constant 0 : index
    %40 = vector.load %arg6[%c0_23, %c0_24] : memref<16x256xf32, #tpu.memory_space<vmem>>, vector<16x256xf32>
    tpu.vector_store %arg6[%c0_23, %c0_24], %39 {strides = array<i32>} : memref<16x256xf32, #tpu.memory_space<vmem>>, vector<16x256xf32>,
    return
  }
  func.func @transform_0(%arg0: i32) -> (i32, i32) {
    %c0_i32 = arith.constant 0 : i32
    %c0_i32_0 = arith.constant 0 : i32
    return %arg0, %c0_i32 : i32, i32
  }
  func.func @transform_1(%arg0: i32) -> (i32, i32) {
    %c0_i32 = arith.constant 0 : i32
    %c0_i32_0 = arith.constant 0 : i32
    return %arg0, %c0_i32 : i32, i32
  }
  func.func @transform_2(%arg0: i32) -> (i32, i32) {
    %c0_i32 = arith.constant 0 : i32
    %c0_i32_0 = arith.constant 0 : i32
    return %arg0, %c0_i32 : i32, i32
  }
  func.func @transform_3(%arg0: i32) -> (i32, i32) {
    %c0_i32 = arith.constant 0 : i32
    %c0_i32_0 = arith.constant 0 : i32
    %c0_i32_1 = arith.constant 0 : i32
    return %c0_i32, %c0_i32_0 : i32, i32
  }
  func.func @transform_4(%arg0: i32) -> (i32, i32) {
    %c0_i32 = arith.constant 0 : i32
    %c0_i32_0 = arith.constant 0 : i32
    %c0_i32_1 = arith.constant 0 : i32
    return %c0_i32, %c0_i32_0 : i32, i32
  }
  func.func @transform_5(%arg0: i32) -> (i32, i32) {
    %c0_i32 = arith.constant 0 : i32
    %c0_i32_0 = arith.constant 0 : i32
    return %arg0, %c0_i32 : i32, i32
  }
}

</mosaic_0001>

<llo_original>
// kernel: tpu_custom_call.1
$region0: #{tpu_custom_call.1}
  #allocation0 [shape = 'u32[]', space=smem, size = 0x4, offset = 0x4, fixed_abs, tag = 'smem constant byte address 0x4 - core index']
  #allocation1 [shape = 'u32[144,128]{1,0:T(1,128)}', space=vmem, size = 0x12000, scoped, tag = 'internal scratch']
  %s0 = inlined_call_operand.hbm [shape: f32[16,256], index: 0, kind: input, shape index: {}]
  %s1 = inlined_call_operand.hbm [shape: bf16[16,16], index: 1, kind: input, shape index: {}]
  %s2 = inlined_call_operand.hbm [shape: bf16[512,256], index: 2, kind: input, shape index: {}]
  %s3 = inlined_call_operand.hbm [shape: bf16[256,1024], index: 3, kind: input, shape index: {}]
  %s4 = inlined_call_operand.vmem [shape: f32[1,1024], index: 4, kind: input, shape index: {}]
  %s5 = inlined_call_operand.hbm [shape: f32[16,256], index: 5, kind: output, shape index: {}]
  %s6 = sld [smem:[#allocation0]]
  $region46: #{tpu_custom_call.1} parent=0
    _
  %s8 = ssub.s32 1, %s6
  %s9 = scalar_select 0, %s8, %s6
  $region1: #{tpu_custom_call.1} parent=0
    #allocation2 [shape = 'u8[16384]{0}', space=vmem, size = 0x4000, scoped, tag = 'input window, operand 0, single buffered']
    #allocation3 [shape = 's32[1]{0}', space=sflag, size = 0x4, scoped, tag = 'scoped memory for tpu_custom_call.1']
    #allocation4 [shape = 's32[1]{0}', space=sflag, size = 0x4, scoped, tag = 'scoped memory for tpu_custom_call.1']
    #allocation5 [shape = 'u8[4096]{0}', space=vmem, size = 0x1000, scoped, tag = 'input window, operand 1, single buffered']
    #allocation6 [shape = 's32[1]{0}', space=sflag, size = 0x4, scoped, tag = 'scoped memory for tpu_custom_call.1']
    #allocation7 [shape = 'u8[262144]{0}', space=vmem, size = 0x40000, scoped, tag = 'input window, operand 2, single buffered']
    #allocation8 [shape = 'u8[524288]{0}', space=vmem, size = 0x80000, scoped, tag = 'input window, operand 3, single buffered']
    #allocation9 [shape = 's32[1]{0}', space=sflag, size = 0x4, scoped, tag = 'scoped memory for tpu_custom_call.1']
    #allocation10 [shape = 'u8[16384]{0}', space=vmem, size = 0x4000, scoped, tag = 'output window, operand 0, single buffered']
    %10 = vsyncpa [#allocation3], 0
    %11 = vsyncpa [#allocation6], 0
    %12 = vsyncpa [#allocation9], 0
    %13 = vsyncpa [#allocation4], 0
    // Predicated region
    $region2: #{tpu_custom_call.1} parent=1 // pred_check
      _
    $region3: #{tpu_custom_call.1} parent=1 // pred_check_branch
      %15 = sbr.rel (0) target = $region5
    $region4: #{tpu_custom_call.1} parent=1 // pred_region
      %s17 = ssub.s32 512, 512
      %18 = vsyncadd [#allocation3], %s17
      %s19 = sshll.u32 [#allocation2], 4
      %s20 = int_to_ptr.vmem [resolvable:$true] %s19
      %25 = dma.hbm_to_vmem [thread:$0]  %s0, 512, %s20, [#allocation3], 256, 256, 16
    $region5: #{tpu_custom_call.1} parent=1 // pred_fallthru
      _
    // Predicated region
    $region6: #{tpu_custom_call.1} parent=1 // pred_check
      _
    $region7: #{tpu_custom_call.1} parent=1 // pred_check_branch
      %27 = sbr.rel (0) target = $region9
    $region8: #{tpu_custom_call.1} parent=1 // pred_region
      %s29 = ssub.s32 128, 128
      %30 = vsyncadd [#allocation6], %s29
      %s31 = sshll.u32 [#allocation5], 4
      %s32 = int_to_ptr.vmem [resolvable:$true] %s31
      %37 = dma.hbm_to_vmem [thread:$0]  %s1, 128, %s32, [#allocation6], 64, 64, 4
    $region9: #{tpu_custom_call.1} parent=1 // pred_fallthru
      _
    // Predicated region
    $region10: #{tpu_custom_call.1} parent=1 // pred_check
      _
    $region11: #{tpu_custom_call.1} parent=1 // pred_check_branch
      %39 = sbr.rel (0) target = $region13
    $region12: #{tpu_custom_call.1} parent=1 // pred_region
      %s41 = ssub.s32 8192, 8192
      %42 = vsyncadd [#allocation6], %s41
      %s43 = sshll.u32 [#allocation7], 4
      %s44 = int_to_ptr.vmem [resolvable:$true] %s43
      %49 = dma.hbm_to_vmem [thread:$0]  %s2, 8192, %s44, [#allocation6], 128, 128, 8
    $region13: #{tpu_custom_call.1} parent=1 // pred_fallthru
      _
    // Predicated region
    $region14: #{tpu_custom_call.1} parent=1 // pred_check
      _
    $region15: #{tpu_custom_call.1} parent=1 // pred_check_branch
      %51 = sbr.rel (0) target = $region17
    $region16: #{tpu_custom_call.1} parent=1 // pred_region
      %s53 = ssub.s32 16384, 16384
      %54 = vsyncadd [#allocation9], %s53
      %s55 = sshll.u32 [#allocation8], 4
      %s56 = int_to_ptr.vmem [resolvable:$true] %s55
      %61 = dma.hbm_to_vmem [thread:$0]  %s3, 16384, %s56, [#allocation9], 512, 512, 32
    $region17: #{tpu_custom_call.1} parent=1 // pred_fallthru
      _
    // Predicated region
    $region18: #{tpu_custom_call.1} parent=1 // pred_check
      _
    $region19: #{tpu_custom_call.1} parent=1 // pred_check_branch
      %63 = sbr.rel (0) target = $region21
    $region20: #{tpu_custom_call.1} parent=1 // pred_region
      _
    $region21: #{tpu_custom_call.1} parent=1 // pred_fallthru
      _
    // Predicated region
    $region22: #{tpu_custom_call.1} parent=1 // pred_check
      _
    $region23: #{tpu_custom_call.1} parent=1 // pred_check_branch
      %65 = sbr.rel (0) target = $region25
    $region24: #{tpu_custom_call.1} parent=1 // pred_region
      %66 = dma.done [#allocation3], 512
    $region25: #{tpu_custom_call.1} parent=1 // pred_fallthru
      _
    // Predicated region
    $region26: #{tpu_custom_call.1} parent=1 // pred_check
      _
    $region27: #{tpu_custom_call.1} parent=1 // pred_check_branch
      %68 = sbr.rel (0) target = $region29
    $region28: #{tpu_custom_call.1} parent=1 // pred_region
      %69 = dma.done [#allocation6], 128
    $region29: #{tpu_custom_call.1} parent=1 // pred_fallthru
      _
    // Predicated region
    $region30: #{tpu_custom_call.1} parent=1 // pred_check
      _
    $region31: #{tpu_custom_call.1} parent=1 // pred_check_branch
      %71 = sbr.rel (0) target = $region33
    $region32: #{tpu_custom_call.1} parent=1 // pred_region
      %72 = dma.done [#allocation6], 8192
    $region33: #{tpu_custom_call.1} parent=1 // pred_fallthru
      _
    // Predicated region
    $region34: #{tpu_custom_call.1} parent=1 // pred_check
      _
    $region35: #{tpu_custom_call.1} parent=1 // pred_check_branch
      %74 = sbr.rel (0) target = $region37
    $region36: #{tpu_custom_call.1} parent=1 // pred_region
      %75 = dma.done [#allocation9], 16384
    $region37: #{tpu_custom_call.1} parent=1 // pred_fallthru
      _
    %v77 = vld [vmem:[#allocation8] sm:$0xff]
    %v78 = vld [vmem:[#allocation8 + $0x8] sm:$0xff]
    %v79 = vld [vmem:[#allocation8 + $0x20] sm:$0xff]
    %v80 = vld [vmem:[#allocation8 + $0x28] sm:$0xff]
    %v81 = vld [vmem:[#allocation8 + $0x40] sm:$0xff]
    %v82 = vld [vmem:[#allocation8 + $0x48] sm:$0xff]
    %v83 = vld [vmem:[#allocation8 + $0x60] sm:$0xff]
    %v84 = vld [vmem:[#allocation8 + $0x68] sm:$0xff]
    %v85 = vld [vmem:[#allocation8 + $0x80] sm:$0xff]
    %v86 = vld [vmem:[#allocation8 + $0x88] sm:$0xff]
    %v87 = vld [vmem:[#allocation8 + $0xa0] sm:$0xff]
    %v88 = vld [vmem:[#allocation8 + $0xa8] sm:$0xff]
    %v89 = vld [vmem:[#allocation8 + $0xc0] sm:$0xff]
    %v90 = vld [vmem:[#allocation8 + $0xc8] sm:$0xff]
    %v91 = vld [vmem:[#allocation8 + $0xe0] sm:$0xff]
    %v92 = vld [vmem:[#allocation8 + $0xe8] sm:$0xff]
    %v93 = vld [vmem:[#allocation8 + $0x100] sm:$0xff]
    %v94 = vld [vmem:[#allocation8 + $0x108] sm:$0xff]
    %v95 = vld [vmem:[#allocation8 + $0x120] sm:$0xff]
    %v96 = vld [vmem:[#allocation8 + $0x128] sm:$0xff]
    %v97 = vld [vmem:[#allocation8 + $0x140] sm:$0xff]
    %v98 = vld [vmem:[#allocation8 + $0x148] sm:$0xff]
    %v99 = vld [vmem:[#allocation8 + $0x160] sm:$0xff]
    %v100 = vld [vmem:[#allocation8 + $0x168] sm:$0xff]
    %v101 = vld [vmem:[#allocation8 + $0x180] sm:$0xff]
    %v102 = vld [vmem:[#allocation8 + $0x188] sm:$0xff]
    %v103 = vld [vmem:[#allocation8 + $0x1a0] sm:$0xff]
    %v104 = vld [vmem:[#allocation8 + $0x1a8] sm:$0xff]
    %v105 = vld [vmem:[#allocation8 + $0x1c0] sm:$0xff]
    %v106 = vld [vmem:[#allocation8 + $0x1c8] sm:$0xff]
    %v107 = vld [vmem:[#allocation8 + $0x1e0] sm:$0xff]
    %v108 = vld [vmem:[#allocation8 + $0x1e8] sm:$0xff]
    %v109 = vld [vmem:[#allocation8 + $0x200] sm:$0xff]
    %v110 = vld [vmem:[#allocation8 + $0x208] sm:$0xff]
    %v111 = vld [vmem:[#allocation8 + $0x220] sm:$0xff]
    %v112 = vld [vmem:[#allocation8 + $0x228] sm:$0xff]
    %v113 = vld [vmem:[#allocation8 + $0x240] sm:$0xff]
    %v114 = vld [vmem:[#allocation8 + $0x248] sm:$0xff]
    %v115 = vld [vmem:[#allocation8 + $0x260] sm:$0xff]
    %v116 = vld [vmem:[#allocation8 + $0x268] sm:$0xff]
    %v117 = vld [vmem:[#allocation8 + $0x280] sm:$0xff]
    %v118 = vld [vmem:[#allocation8 + $0x288] sm:$0xff]
    %v119 = vld [vmem:[#allocation8 + $0x2a0] sm:$0xff]
    %v120 = vld [vmem:[#allocation8 + $0x2a8] sm:$0xff]
    %v121 = vld [vmem:[#allocation8 + $0x2c0] sm:$0xff]
    %v122 = vld [vmem:[#allocation8 + $0x2c8] sm:$0xff]
    %v123 = vld [vmem:[#allocation8 + $0x2e0] sm:$0xff]
    %v124 = vld [vmem:[#allocation8 + $0x2e8] sm:$0xff]
    %v125 = vld [vmem:[#allocation8 + $0x300] sm:$0xff]
    %v126 = vld [vmem:[#allocation8 + $0x308] sm:$0xff]
    %v127 = vld [vmem:[#allocation8 + $0x320] sm:$0xff]
    %v128 = vld [vmem:[#allocation8 + $0x328] sm:$0xff]
    %v129 = vld [vmem:[#allocation8 + $0x340] sm:$0xff]
    %v130 = vld [vmem:[#allocation8 + $0x348] sm:$0xff]
    %v131 = vld [vmem:[#allocation8 + $0x360] sm:$0xff]
    %v132 = vld [vmem:[#allocation8 + $0x368] sm:$0xff]
    %v133 = vld [vmem:[#allocation8 + $0x380] sm:$0xff]
    %v134 = vld [vmem:[#allocation8 + $0x388] sm:$0xff]
    %v135 = vld [vmem:[#allocation8 + $0x3a0] sm:$0xff]
    %v136 = vld [vmem:[#allocation8 + $0x3a8] sm:$0xff]
    %v137 = vld [vmem:[#allocation8 + $0x3c0] sm:$0xff]
    %v138 = vld [vmem:[#allocation8 + $0x3c8] sm:$0xff]
    %v139 = vld [vmem:[#allocation8 + $0x3e0] sm:$0xff]
    %v140 = vld [vmem:[#allocation8 + $0x3e8] sm:$0xff]
    %v141 = vld [vmem:[#allocation8 + $0x10] sm:$0xff]
    %v142 = vld [vmem:[#allocation8 + $0x30] sm:$0xff]
    %v143 = vld [vmem:[#allocation8 + $0x50] sm:$0xff]
    %v144 = vld [vmem:[#allocation8 + $0x70] sm:$0xff]
    %v145 = vld [vmem:[#allocation8 + $0x90] sm:$0xff]
    %v146 = vld [vmem:[#allocation8 + $0xb0] sm:$0xff]
    %v147 = vld [vmem:[#allocation8 + $0xd0] sm:$0xff]
    %v148 = vld [vmem:[#allocation8 + $0xf0] sm:$0xff]
    %v149 = vld [vmem:[#allocation8 + $0x110] sm:$0xff]
    %v150 = vld [vmem:[#allocation8 + $0x130] sm:$0xff]
    %v151 = vld [vmem:[#allocation8 + $0x150] sm:$0xff]
    %v152 = vld [vmem:[#allocation8 + $0x170] sm:$0xff]
    %v153 = vld [vmem:[#allocation8 + $0x190] sm:$0xff]
    %v154 = vld [vmem:[#allocation8 + $0x1b0] sm:$0xff]
    %v155 = vld [vmem:[#allocation8 + $0x1d0] sm:$0xff]
    %v156 = vld [vmem:[#allocation8 + $0x1f0] sm:$0xff]
    %v157 = vld [vmem:[#allocation8 + $0x210] sm:$0xff]
    %v158 = vld [vmem:[#allocation8 + $0x230] sm:$0xff]
    %v159 = vld [vmem:[#allocation8 + $0x250] sm:$0xff]
    %v160 = vld [vmem:[#allocation8 + $0x270] sm:$0xff]
    %v161 = vld [vmem:[#allocation8 + $0x290] sm:$0xff]
    %v162 = vld [vmem:[#allocation8 + $0x2b0] sm:$0xff]
    %v163 = vld [vmem:[#allocation8 + $0x2d0] sm:$0xff]
    %v164 = vld [vmem:[#allocation8 + $0x2f0] sm:$0xff]
    %v165 = vld [vmem:[#allocation8 + $0x310] sm:$0xff]
    %v166 = vld [vmem:[#allocation8 + $0x330] sm:$0xff]
    %v167 = vld [vmem:[#allocation8 + $0x350] sm:$0xff]
    %v168 = vld [vmem:[#allocation8 + $0x370] sm:$0xff]
    %v169 = vld [vmem:[#allocation8 + $0x390] sm:$0xff]
    %v170 = vld [vmem:[#allocation8 + $0x3b0] sm:$0xff]
    %v171 = vld [vmem:[#allocation8 + $0x3d0] sm:$0xff]
    %v172 = vld [vmem:[#allocation8 + $0x3f0] sm:$0xff]
    %v173 = vld [vmem:[#allocation8 + $0x18] sm:$0xff]
    %v174 = vld [vmem:[#allocation8 + $0x38] sm:$0xff]
    %v175 = vld [vmem:[#allocation8 + $0x58] sm:$0xff]
    %v176 = vld [vmem:[#allocation8 + $0x78] sm:$0xff]
    %v177 = vld [vmem:[#allocation8 + $0x98] sm:$0xff]
    %v178 = vld [vmem:[#allocation8 + $0xb8] sm:$0xff]
    %v179 = vld [vmem:[#allocation8 + $0xd8] sm:$0xff]
    %v180 = vld [vmem:[#allocation8 + $0xf8] sm:$0xff]
    %v181 = vld [vmem:[#allocation8 + $0x118] sm:$0xff]
    %v182 = vld [vmem:[#allocation8 + $0x138] sm:$0xff]
    %v183 = vld [vmem:[#allocation8 + $0x158] sm:$0xff]
    %v184 = vld [vmem:[#allocation8 + $0x178] sm:$0xff]
    %v185 = vld [vmem:[#allocation8 + $0x198] sm:$0xff]
    %v186 = vld [vmem:[#allocation8 + $0x1b8] sm:$0xff]
    %v187 = vld [vmem:[#allocation8 + $0x1d8] sm:$0xff]
    %v188 = vld [vmem:[#allocation8 + $0x1f8] sm:$0xff]
    %v189 = vld [vmem:[#allocation8 + $0x218] sm:$0xff]
    %v190 = vld [vmem:[#allocation8 + $0x238] sm:$0xff]
    %v191 = vld [vmem:[#allocation8 + $0x258] sm:$0xff]
    %v192 = vld [vmem:[#allocation8 + $0x278] sm:$0xff]
    %v193 = vld [vmem:[#allocation8 + $0x298] sm:$0xff]
    %v194 = vld [vmem:[#allocation8 + $0x2b8] sm:$0xff]
    %v195 = vld [vmem:[#allocation8 + $0x2d8] sm:$0xff]
    %v196 = vld [vmem:[#allocation8 + $0x2f8] sm:$0xff]
    %v197 = vld [vmem:[#allocation8 + $0x318] sm:$0xff]
    %v198 = vld [vmem:[#allocation8 + $0x338] sm:$0xff]
    %v199 = vld [vmem:[#allocation8 + $0x358] sm:$0xff]
    %v200 = vld [vmem:[#allocation8 + $0x378] sm:$0xff]
    %v201 = vld [vmem:[#allocation8 + $0x398] sm:$0xff]
    %v202 = vld [vmem:[#allocation8 + $0x3b8] sm:$0xff]
    %v203 = vld [vmem:[#allocation8 + $0x3d8] sm:$0xff]
    %v204 = vld [vmem:[#allocation8 + $0x3f8] sm:$0xff]
    %v205 = vld [vmem:[#allocation2] sm:$0xff]
    %v206 = vld [vmem:[#allocation2 + $0x8] sm:$0xff]
    %v207 = vld [vmem:[#allocation2 + $0x10] sm:$0xff]
    %v208 = vld [vmem:[#allocation2 + $0x18] sm:$0xff]
    %v209 = vmax.f32 %v205, 0.0
    %v210 = vmax.f32 %v206, 0.0
    %v211 = vmax.f32 %v207, 0.0
    %v212 = vmax.f32 %v208, 0.0
    %v213 = vpack.c.bf16 %v211, %v209
    %v214 = vpack.c.bf16 %v212, %v210
    %v215 = vld [vmem:[%s4] sm:$0xf]
    %v217 = vlaneseq
    %v218 = vshrl.u32 %v217, 7
    %v219 = vsub.s32 0, %v218
    %v220 = vrot.slane %v215, %v219
    %v221 = vlaneseq
    %v222 = vshrl.u32 %v221, 7
    %v223 = vsub.s32 1, %v222
    %v224 = vrot.slane %v215, %v223
    %v225 = vlaneseq
    %v226 = vshrl.u32 %v225, 7
    %v227 = vsub.s32 2, %v226
    %v228 = vrot.slane %v215, %v227
    %v229 = vlaneseq
    %v230 = vshrl.u32 %v229, 7
    %v231 = vsub.s32 3, %v230
    %v232 = vrot.slane %v215, %v231
    %v301 = vunpack.c.l.b16 %v77
    %v302 = vunpack.c.h.b16 %v77
    %v303 = vunpack.c.l.b16 %v78
    %v304 = vunpack.c.h.b16 %v78
    %v305 = vunpack.c.l.b16 %v79
    %v306 = vunpack.c.h.b16 %v79
    %v307 = vunpack.c.l.b16 %v80
    %v308 = vunpack.c.h.b16 %v80
    %v309 = vunpack.c.l.b16 %v81
    %v310 = vunpack.c.h.b16 %v81
    %v311 = vunpack.c.l.b16 %v82
    %v312 = vunpack.c.h.b16 %v82
    %v313 = vunpack.c.l.b16 %v83
    %v314 = vunpack.c.h.b16 %v83
    %v315 = vunpack.c.l.b16 %v84
    %v316 = vunpack.c.h.b16 %v84
    %v317 = vunpack.c.l.b16 %v85
    %v318 = vunpack.c.h.b16 %v85
    %v319 = vunpack.c.l.b16 %v86
    %v320 = vunpack.c.h.b16 %v86
    %v321 = vunpack.c.l.b16 %v87
    %v322 = vunpack.c.h.b16 %v87
    %v323 = vunpack.c.l.b16 %v88
    %v324 = vunpack.c.h.b16 %v88
    %v325 = vunpack.c.l.b16 %v89
    %v326 = vunpack.c.h.b16 %v89
    %v327 = vunpack.c.l.b16 %v90
    %v328 = vunpack.c.h.b16 %v90
    %v329 = vunpack.c.l.b16 %v91
    %v330 = vunpack.c.h.b16 %v91
    %v331 = vunpack.c.l.b16 %v92
    %v332 = vunpack.c.h.b16 %v92
    %v333 = vunpack.c.l.b16 %v93
    %v334 = vunpack.c.h.b16 %v93
    %v335 = vunpack.c.l.b16 %v94
    %v336 = vunpack.c.h.b16 %v94
    %v337 = vunpack.c.l.b16 %v95
    %v338 = vunpack.c.h.b16 %v95
    %v339 = vunpack.c.l.b16 %v96
    %v340 = vunpack.c.h.b16 %v96
    %v341 = vunpack.c.l.b16 %v97
    %v342 = vunpack.c.h.b16 %v97
    %v343 = vunpack.c.l.b16 %v98
    %v344 = vunpack.c.h.b16 %v98
    %v345 = vunpack.c.l.b16 %v99
    %v346 = vunpack.c.h.b16 %v99
    %v347 = vunpack.c.l.b16 %v100
    %v348 = vunpack.c.h.b16 %v100
    %v349 = vunpack.c.l.b16 %v101
    %v350 = vunpack.c.h.b16 %v101
    %v351 = vunpack.c.l.b16 %v102
    %v352 = vunpack.c.h.b16 %v102
    %v353 = vunpack.c.l.b16 %v103
    %v354 = vunpack.c.h.b16 %v103
    %v355 = vunpack.c.l.b16 %v104
    %v356 = vunpack.c.h.b16 %v104
    %v357 = vunpack.c.l.b16 %v105
    %v358 = vunpack.c.h.b16 %v105
    %v359 = vunpack.c.l.b16 %v106
    %v360 = vunpack.c.h.b16 %v106
    %v361 = vunpack.c.l.b16 %v107
    %v362 = vunpack.c.h.b16 %v107
    %v363 = vunpack.c.l.b16 %v108
    %v364 = vunpack.c.h.b16 %v108
    %v365 = vunpack.c.l.b16 %v109
    %v366 = vunpack.c.h.b16 %v109
    %v367 = vunpack.c.l.b16 %v110
    %v368 = vunpack.c.h.b16 %v110
    %v369 = vunpack.c.l.b16 %v111
    %v370 = vunpack.c.h.b16 %v111
    %v371 = vunpack.c.l.b16 %v112
    %v372 = vunpack.c.h.b16 %v112
    %v373 = vunpack.c.l.b16 %v113
    %v374 = vunpack.c.h.b16 %v113
    %v375 = vunpack.c.l.b16 %v114
    %v376 = vunpack.c.h.b16 %v114
    %v377 = vunpack.c.l.b16 %v115
    %v378 = vunpack.c.h.b16 %v115
    %v379 = vunpack.c.l.b16 %v116
    %v380 = vunpack.c.h.b16 %v116
    %v381 = vunpack.c.l.b16 %v117
    %v382 = vunpack.c.h.b16 %v117
    %v383 = vunpack.c.l.b16 %v118
    %v384 = vunpack.c.h.b16 %v118
    %v385 = vunpack.c.l.b16 %v119
    %v386 = vunpack.c.h.b16 %v119
    %v387 = vunpack.c.l.b16 %v120
    %v388 = vunpack.c.h.b16 %v120
    %v389 = vunpack.c.l.b16 %v121
    %v390 = vunpack.c.h.b16 %v121
    %v391 = vunpack.c.l.b16 %v122
    %v392 = vunpack.c.h.b16 %v122
    %v393 = vunpack.c.l.b16 %v123
    %v394 = vunpack.c.h.b16 %v123
    %v395 = vunpack.c.l.b16 %v124
    %v396 = vunpack.c.h.b16 %v124
    %v397 = vunpack.c.l.b16 %v125
    %v398 = vunpack.c.h.b16 %v125
    %v399 = vunpack.c.l.b16 %v126
    %v400 = vunpack.c.h.b16 %v126
    %v401 = vunpack.c.l.b16 %v127
    %v402 = vunpack.c.h.b16 %v127
    %v403 = vunpack.c.l.b16 %v128
    %v404 = vunpack.c.h.b16 %v128
    %v405 = vunpack.c.l.b16 %v129
    %v406 = vunpack.c.h.b16 %v129
    %v407 = vunpack.c.l.b16 %v130
    %v408 = vunpack.c.h.b16 %v130
    %v409 = vunpack.c.l.b16 %v131
    %v410 = vunpack.c.h.b16 %v131
    %v411 = vunpack.c.l.b16 %v132
    %v412 = vunpack.c.h.b16 %v132
    %v413 = vunpack.c.l.b16 %v133
    %v414 = vunpack.c.h.b16 %v133
    %v415 = vunpack.c.l.b16 %v134
    %v416 = vunpack.c.h.b16 %v134
    %v417 = vunpack.c.l.b16 %v135
    %v418 = vunpack.c.h.b16 %v135
    %v419 = vunpack.c.l.b16 %v136
    %v420 = vunpack.c.h.b16 %v136
    %v421 = vunpack.c.l.b16 %v137
    %v422 = vunpack.c.h.b16 %v137
    %v423 = vunpack.c.l.b16 %v138
    %v424 = vunpack.c.h.b16 %v138
    %v425 = vunpack.c.l.b16 %v139
    %v426 = vunpack.c.h.b16 %v139
    %v427 = vunpack.c.l.b16 %v140
    %v428 = vunpack.c.h.b16 %v140
    %v429 = vpack.c.b16 %v305, %v301
    %v430 = vpack.c.b16 %v306, %v302
    %v431 = vpack.c.b16 %v307, %v303
    %v432 = vpack.c.b16 %v308, %v304
    %v433 = vpack.c.b16 %v313, %v309
    %v434 = vpack.c.b16 %v314, %v310
    %v435 = vpack.c.b16 %v315, %v311
    %v436 = vpack.c.b16 %v316, %v312
    %v437 = vpack.c.b16 %v321, %v317
    %v438 = vpack.c.b16 %v322, %v318
    %v439 = vpack.c.b16 %v323, %v319
    %v440 = vpack.c.b16 %v324, %v320
    %v441 = vpack.c.b16 %v329, %v325
    %v442 = vpack.c.b16 %v330, %v326
    %v443 = vpack.c.b16 %v331, %v327
    %v444 = vpack.c.b16 %v332, %v328
    %v445 = vpack.c.b16 %v337, %v333
    %v446 = vpack.c.b16 %v338, %v334
    %v447 = vpack.c.b16 %v339, %v335
    %v448 = vpack.c.b16 %v340, %v336
    %v449 = vpack.c.b16 %v345, %v341
    %v450 = vpack.c.b16 %v346, %v342
    %v451 = vpack.c.b16 %v347, %v343
    %v452 = vpack.c.b16 %v348, %v344
    %v453 = vpack.c.b16 %v353, %v349
    %v454 = vpack.c.b16 %v354, %v350
    %v455 = vpack.c.b16 %v355, %v351
    %v456 = vpack.c.b16 %v356, %v352
    %v457 = vpack.c.b16 %v361, %v357
    %v458 = vpack.c.b16 %v362, %v358
    %v459 = vpack.c.b16 %v363, %v359
    %v460 = vpack.c.b16 %v364, %v360
    %v461 = vpack.c.b16 %v369, %v365
    %v462 = vpack.c.b16 %v370, %v366
    %v463 = vpack.c.b16 %v371, %v367
    %v464 = vpack.c.b16 %v372, %v368
    %v465 = vpack.c.b16 %v377, %v373
    %v466 = vpack.c.b16 %v378, %v374
    %v467 = vpack.c.b16 %v379, %v375
    %v468 = vpack.c.b16 %v380, %v376
    %v469 = vpack.c.b16 %v385, %v381
    %v470 = vpack.c.b16 %v386, %v382
    %v471 = vpack.c.b16 %v387, %v383
    %v472 = vpack.c.b16 %v388, %v384
    %v473 = vpack.c.b16 %v393, %v389
    %v474 = vpack.c.b16 %v394, %v390
    %v475 = vpack.c.b16 %v395, %v391
    %v476 = vpack.c.b16 %v396, %v392
    %v477 = vpack.c.b16 %v401, %v397
    %v478 = vpack.c.b16 %v402, %v398
    %v479 = vpack.c.b16 %v403, %v399
    %v480 = vpack.c.b16 %v404, %v400
    %v481 = vpack.c.b16 %v409, %v405
    %v482 = vpack.c.b16 %v410, %v406
    %v483 = vpack.c.b16 %v411, %v407
    %v484 = vpack.c.b16 %v412, %v408
    %v485 = vpack.c.b16 %v417, %v413
    %v486 = vpack.c.b16 %v418, %v414
    %v487 = vpack.c.b16 %v419, %v415
    %v488 = vpack.c.b16 %v420, %v416
    %v489 = vpack.c.b16 %v425, %v421
    %v490 = vpack.c.b16 %v426, %v422
    %v491 = vpack.c.b16 %v427, %v423
    %v492 = vpack.c.b16 %v428, %v424
    %557 = vmatprep.subr.bf16.mxu0 %v430
    %558 = vmatpush1.bf16.msra.mxu0 %v429
    %559 = vmatprep.subr.bf16.mxu0 %v434
    %560 = vmatpush1.bf16.msra.mxu0 %v433
    %561 = vmatprep.subr.bf16.mxu0 %v438
    %562 = vmatpush1.bf16.msra.mxu0 %v437
    %563 = vmatprep.subr.bf16.mxu0 %v442
    %564 = vmatpush1.bf16.msra.mxu0 %v441
    %565 = vmatprep.subr.bf16.mxu0 %v446
    %566 = vmatpush1.bf16.msra.mxu0 %v445
    %567 = vmatprep.subr.bf16.mxu0 %v450
    %568 = vmatpush1.bf16.msra.mxu0 %v449
    %569 = vmatprep.subr.bf16.mxu0 %v454
    %570 = vmatpush1.bf16.msra.mxu0 %v453
    %571 = vmatprep.subr.bf16.mxu0 %v458
    %572 = vmatpush1.bf16.msra.mxu0 %v457
    %573 = vmatprep.subr.bf16.mxu0 %v462
    %574 = vmatpush1.bf16.msra.mxu0 %v461
    %575 = vmatprep.subr.bf16.mxu0 %v466
    %576 = vmatpush1.bf16.msra.mxu0 %v465
    %577 = vmatprep.subr.bf16.mxu0 %v470
    %578 = vmatpush1.bf16.msra.mxu0 %v469
    %579 = vmatprep.subr.bf16.mxu0 %v474
    %580 = vmatpush1.bf16.msra.mxu0 %v473
    %581 = vmatprep.subr.bf16.mxu0 %v478
    %582 = vmatpush1.bf16.msra.mxu0 %v477
    %583 = vmatprep.subr.bf16.mxu0 %v482
    %584 = vmatpush1.bf16.msra.mxu0 %v481
    %585 = vmatprep.subr.bf16.mxu0 %v486
    %586 = vmatpush1.bf16.msra.mxu0 %v485
    %587 = vmatprep.subr.bf16.mxu0 %v490
    %588 = vmatpush1.bf16.msra.mxu0 %v489
    %589 = vmatprep.mubr.bf16.mxu0 %v214
    %590 = vmatmul.mubr.bf16.gmra.mrb[0].mxu0 %v213
    %v591 = vpop.f32.mrb[0].mxu0
    %v592 = vadd.f32 %v220, %v591
    %v593 = vpop.f32.mrb[0].mxu0
    %v594 = vadd.f32 %v224, %v593
    %v595 = vpop.f32.mrb[0].mxu0
    %v596 = vadd.f32 %v220, %v595
    %v597 = vpop.f32.mrb[0].mxu0
    %v598 = vadd.f32 %v224, %v597
    %599 = vdwg.mxu0
    %600 = vmatprep.subr.bf16.mxu0 %v432
    %601 = vmatpush1.bf16.msra.mxu0 %v431
    %602 = vmatprep.subr.bf16.mxu0 %v436
    %603 = vmatpush1.bf16.msra.mxu0 %v435
    %604 = vmatprep.subr.bf16.mxu0 %v440
    %605 = vmatpush1.bf16.msra.mxu0 %v439
    %606 = vmatprep.subr.bf16.mxu0 %v444
    %607 = vmatpush1.bf16.msra.mxu0 %v443
    %608 = vmatprep.subr.bf16.mxu0 %v448
    %609 = vmatpush1.bf16.msra.mxu0 %v447
    %610 = vmatprep.subr.bf16.mxu0 %v452
    %611 = vmatpush1.bf16.msra.mxu0 %v451
    %612 = vmatprep.subr.bf16.mxu0 %v456
    %613 = vmatpush1.bf16.msra.mxu0 %v455
    %614 = vmatprep.subr.bf16.mxu0 %v460
    %615 = vmatpush1.bf16.msra.mxu0 %v459
    %616 = vmatprep.subr.bf16.mxu0 %v464
    %617 = vmatpush1.bf16.msra.mxu0 %v463
    %618 = vmatprep.subr.bf16.mxu0 %v468
    %619 = vmatpush1.bf16.msra.mxu0 %v467
    %620 = vmatprep.subr.bf16.mxu0 %v472
    %621 = vmatpush1.bf16.msra.mxu0 %v471
    %622 = vmatprep.subr.bf16.mxu0 %v476
    %623 = vmatpush1.bf16.msra.mxu0 %v475
    %624 = vmatprep.subr.bf16.mxu0 %v480
    %625 = vmatpush1.bf16.msra.mxu0 %v479
    %626 = vmatprep.subr.bf16.mxu0 %v484
    %627 = vmatpush1.bf16.msra.mxu0 %v483
    %628 = vmatprep.subr.bf16.mxu0 %v488
    %629 = vmatpush1.bf16.msra.mxu0 %v487
    %630 = vmatprep.subr.bf16.mxu0 %v492
    %631 = vmatpush1.bf16.msra.mxu0 %v491
    %632 = vmatprep.mubr.bf16.mxu0 %v214
    %633 = vmatmul.mubr.bf16.gmra.mrb[0].mxu0 %v213
    %v634 = vpop.f32.mrb[0].mxu0
    %v635 = vadd.f32 %v228, %v634
    %v636 = vpop.f32.mrb[0].mxu0
    %v637 = vadd.f32 %v232, %v636
    %v638 = vpop.f32.mrb[0].mxu0
    %v639 = vadd.f32 %v228, %v638
    %v640 = vpop.f32.mrb[0].mxu0
    %v641 = vadd.f32 %v232, %v640
    %642 = vdwg.mxu0
    %v643 = vld [vmem:[#allocation5] sm:$0xf]
    %v644 = vld [vmem:[#allocation5 + $0x4] sm:$0xf]
    %v645 = vpack.c.bf16 %v596, %v592
    %v646 = vpack.c.bf16 %v598, %v594
    %v649 = vunpack.c.l.b16 %v643
    %v650 = vunpack.c.l.b16 %v644
    %v651 = vpack.c.b16 %v650, %v649
    %vm652 = vcmask 130048
    %v654 = vsel %vm652, %v651, 0
    %656 = vmatprep.subr.bf16.mxu0 %v646
    %657 = vmatpush1.bf16.msra.mxu0 %v645
    %658 = vmatprep.subr.bf16.mxu0 0
    %659 = vmatpush1.bf16.msra.mxu0 0
    %660 = vmatprep.subr.bf16.mxu0 0
    %661 = vmatpush1.bf16.msra.mxu0 0
    %662 = vmatprep.subr.bf16.mxu0 0
    %663 = vmatpush1.bf16.msra.mxu0 0
    %664 = vmatprep.subr.bf16.mxu0 0
    %665 = vmatpush1.bf16.msra.mxu0 0
    %666 = vmatprep.subr.bf16.mxu0 0
    %667 = vmatpush1.bf16.msra.mxu0 0
    %668 = vmatprep.subr.bf16.mxu0 0
    %669 = vmatpush1.bf16.msra.mxu0 0
    %670 = vmatprep.subr.bf16.mxu0 0
    %671 = vmatpush1.bf16.msra.mxu0 0
    %672 = vmatprep.subr.bf16.mxu0 0
    %673 = vmatpush1.bf16.msra.mxu0 0
    %674 = vmatprep.subr.bf16.mxu0 0
    %675 = vmatpush1.bf16.msra.mxu0 0
    %676 = vmatprep.subr.bf16.mxu0 0
    %677 = vmatpush1.bf16.msra.mxu0 0
    %678 = vmatprep.subr.bf16.mxu0 0
    %679 = vmatpush1.bf16.msra.mxu0 0
    %680 = vmatprep.subr.bf16.mxu0 0
    %681 = vmatpush1.bf16.msra.mxu0 0
    %682 = vmatprep.subr.bf16.mxu0 0
    %683 = vmatpush1.bf16.msra.mxu0 0
    %684 = vmatprep.subr.bf16.mxu0 0
    %685 = vmatpush1.bf16.msra.mxu0 0
    %686 = vmatprep.subr.bf16.mxu0 0
    %687 = vmatpush1.bf16.msra.mxu0 0
    %688 = vmatprep.mubr.bf16.mxu0 0
    %689 = vmatmul.mubr.bf16.gmra.mrb[0].mxu0 %v654
    %v690 = vpop.f32.mrb[0].mxu0
    %v691 = vadd.f32 0.0, %v690
    %v692 = vpop.f32.mrb[0].mxu0
    %v693 = vadd.f32 0.0, %v692
    %v694 = vpop.f32.mrb[0].mxu0
    %v695 = vadd.f32 0.0, %v694
    %v696 = vpop.f32.mrb[0].mxu0
    %v697 = vadd.f32 0.0, %v696
    %698 = vdwg.mxu0
    %v699 = vpack.c.bf16 %v639, %v635
    %v700 = vpack.c.bf16 %v641, %v637
    %v701 = vld [vmem:[#allocation7] sm:$0xff]
    %v702 = vld [vmem:[#allocation7 + $0x8] sm:$0xff]
    %v703 = vld [vmem:[#allocation7 + $0x10] sm:$0xff]
    %v704 = vld [vmem:[#allocation7 + $0x18] sm:$0xff]
    %v705 = vld [vmem:[#allocation7 + $0x20] sm:$0xff]
    %v706 = vld [vmem:[#allocation7 + $0x28] sm:$0xff]
    %v707 = vld [vmem:[#allocation7 + $0x30] sm:$0xff]
    %v708 = vld [vmem:[#allocation7 + $0x38] sm:$0xff]
    %v709 = vld [vmem:[#allocation7 + $0x40] sm:$0xff]
    %v710 = vld [vmem:[#allocation7 + $0x48] sm:$0xff]
    %v711 = vld [vmem:[#allocation7 + $0x50] sm:$0xff]
    %v712 = vld [vmem:[#allocation7 + $0x58] sm:$0xff]
    %v713 = vld [vmem:[#allocation7 + $0x60] sm:$0xff]
    %v714 = vld [vmem:[#allocation7 + $0x68] sm:$0xff]
    %v715 = vld [vmem:[#allocation7 + $0x70] sm:$0xff]
    %v716 = vld [vmem:[#allocation7 + $0x78] sm:$0xff]
    %v717 = vld [vmem:[#allocation7 + $0x80] sm:$0xff]
    %v718 = vld [vmem:[#allocation7 + $0x88] sm:$0xff]
    %v719 = vld [vmem:[#allocation7 + $0x90] sm:$0xff]
    %v720 = vld [vmem:[#allocation7 + $0x98] sm:$0xff]
    %v721 = vld [vmem:[#allocation7 + $0xa0] sm:$0xff]
    %v722 = vld [vmem:[#allocation7 + $0xa8] sm:$0xff]
    %v723 = vld [vmem:[#allocation7 + $0xb0] sm:$0xff]
    %v724 = vld [vmem:[#allocation7 + $0xb8] sm:$0xff]
    %v725 = vld [vmem:[#allocation7 + $0xc0] sm:$0xff]
    %v726 = vld [vmem:[#allocation7 + $0xc8] sm:$0xff]
    %v727 = vld [vmem:[#allocation7 + $0xd0] sm:$0xff]
    %v728 = vld [vmem:[#allocation7 + $0xd8] sm:$0xff]
    %v729 = vld [vmem:[#allocation7 + $0xe0] sm:$0xff]
    %v730 = vld [vmem:[#allocation7 + $0xe8] sm:$0xff]
    %v731 = vld [vmem:[#allocation7 + $0xf0] sm:$0xff]
    %v732 = vld [vmem:[#allocation7 + $0xf8] sm:$0xff]
    %v765 = vunpack.c.l.b16 %v701
    %v766 = vunpack.c.h.b16 %v701
    %v767 = vunpack.c.l.b16 %v702
    %v768 = vunpack.c.h.b16 %v702
    %v769 = vunpack.c.l.b16 %v703
    %v770 = vunpack.c.h.b16 %v703
    %v771 = vunpack.c.l.b16 %v704
    %v772 = vunpack.c.h.b16 %v704
    %v773 = vunpack.c.l.b16 %v705
    %v774 = vunpack.c.h.b16 %v705
    %v775 = vunpack.c.l.b16 %v706
    %v776 = vunpack.c.h.b16 %v706
    %v777 = vunpack.c.l.b16 %v707
    %v778 = vunpack.c.h.b16 %v707
    %v779 = vunpack.c.l.b16 %v708
    %v780 = vunpack.c.h.b16 %v708
    %v781 = vunpack.c.l.b16 %v709
    %v782 = vunpack.c.h.b16 %v709
    %v783 = vunpack.c.l.b16 %v710
    %v784 = vunpack.c.h.b16 %v710
    %v785 = vunpack.c.l.b16 %v711
    %v786 = vunpack.c.h.b16 %v711
    %v787 = vunpack.c.l.b16 %v712
    %v788 = vunpack.c.h.b16 %v712
    %v789 = vunpack.c.l.b16 %v713
    %v790 = vunpack.c.h.b16 %v713
    %v791 = vunpack.c.l.b16 %v714
    %v792 = vunpack.c.h.b16 %v714
    %v793 = vunpack.c.l.b16 %v715
    %v794 = vunpack.c.h.b16 %v715
    %v795 = vunpack.c.l.b16 %v716
    %v796 = vunpack.c.h.b16 %v716
    %v797 = vunpack.c.l.b16 %v717
    %v798 = vunpack.c.h.b16 %v717
    %v799 = vunpack.c.l.b16 %v718
    %v800 = vunpack.c.h.b16 %v718
    %v801 = vunpack.c.l.b16 %v719
    %v802 = vunpack.c.h.b16 %v719
    %v803 = vunpack.c.l.b16 %v720
    %v804 = vunpack.c.h.b16 %v720
    %v805 = vunpack.c.l.b16 %v721
    %v806 = vunpack.c.h.b16 %v721
    %v807 = vunpack.c.l.b16 %v722
    %v808 = vunpack.c.h.b16 %v722
    %v809 = vunpack.c.l.b16 %v723
    %v810 = vunpack.c.h.b16 %v723
    %v811 = vunpack.c.l.b16 %v724
    %v812 = vunpack.c.h.b16 %v724
    %v813 = vunpack.c.l.b16 %v725
    %v814 = vunpack.c.h.b16 %v725
    %v815 = vunpack.c.l.b16 %v726
    %v816 = vunpack.c.h.b16 %v726
    %v817 = vunpack.c.l.b16 %v727
    %v818 = vunpack.c.h.b16 %v727
    %v819 = vunpack.c.l.b16 %v728
    %v820 = vunpack.c.h.b16 %v728
    %v821 = vunpack.c.l.b16 %v729
    %v822 = vunpack.c.h.b16 %v729
    %v823 = vunpack.c.l.b16 %v730
    %v824 = vunpack.c.h.b16 %v730
    %v825 = vunpack.c.l.b16 %v731
    %v826 = vunpack.c.h.b16 %v731
    %v827 = vunpack.c.l.b16 %v732
    %v828 = vunpack.c.h.b16 %v732
    %v829 = vpack.c.b16 %v767, %v765
    %v830 = vpack.c.b16 %v768, %v766
    %v831 = vpack.c.b16 %v771, %v769
    %v832 = vpack.c.b16 %v772, %v770
    %v833 = vpack.c.b16 %v775, %v773
    %v834 = vpack.c.b16 %v776, %v774
    %v835 = vpack.c.b16 %v779, %v777
    %v836 = vpack.c.b16 %v780, %v778
    %v837 = vpack.c.b16 %v783, %v781
    %v838 = vpack.c.b16 %v784, %v782
    %v839 = vpack.c.b16 %v787, %v785
    %v840 = vpack.c.b16 %v788, %v786
    %v841 = vpack.c.b16 %v791, %v789
    %v842 = vpack.c.b16 %v792, %v790
    %v843 = vpack.c.b16 %v795, %v793
    %v844 = vpack.c.b16 %v796, %v794
    %v845 = vpack.c.b16 %v799, %v797
    %v846 = vpack.c.b16 %v800, %v798
    %v847 = vpack.c.b16 %v803, %v801
    %v848 = vpack.c.b16 %v804, %v802
    %v849 = vpack.c.b16 %v807, %v805
    %v850 = vpack.c.b16 %v808, %v806
    %v851 = vpack.c.b16 %v811, %v809
    %v852 = vpack.c.b16 %v812, %v810
    %v853 = vpack.c.b16 %v815, %v813
    %v854 = vpack.c.b16 %v816, %v814
    %v855 = vpack.c.b16 %v819, %v817
    %v856 = vpack.c.b16 %v820, %v818
    %v857 = vpack.c.b16 %v823, %v821
    %v858 = vpack.c.b16 %v824, %v822
    %v859 = vpack.c.b16 %v827, %v825
    %v860 = vpack.c.b16 %v828, %v826
    %893 = vmatprep.subr.bf16.mxu0 %v830
    %894 = vmatpush1.bf16.msra.mxu0 %v829
    %895 = vmatprep.subr.bf16.mxu0 %v832
    %896 = vmatpush1.bf16.msra.mxu0 %v831
    %897 = vmatprep.subr.bf16.mxu0 %v834
    %898 = vmatpush1.bf16.msra.mxu0 %v833
    %899 = vmatprep.subr.bf16.mxu0 %v836
    %900 = vmatpush1.bf16.msra.mxu0 %v835
    %901 = vmatprep.subr.bf16.mxu0 %v838
    %902 = vmatpush1.bf16.msra.mxu0 %v837
    %903 = vmatprep.subr.bf16.mxu0 %v840
    %904 = vmatpush1.bf16.msra.mxu0 %v839
    %905 = vmatprep.subr.bf16.mxu0 %v842
    %906 = vmatpush1.bf16.msra.mxu0 %v841
    %907 = vmatprep.subr.bf16.mxu0 %v844
    %908 = vmatpush1.bf16.msra.mxu0 %v843
    %909 = vmatprep.subr.bf16.mxu0 %v846
    %910 = vmatpush1.bf16.msra.mxu0 %v845
    %911 = vmatprep.subr.bf16.mxu0 %v848
    %912 = vmatpush1.bf16.msra.mxu0 %v847
    %913 = vmatprep.subr.bf16.mxu0 %v850
    %914 = vmatpush1.bf16.msra.mxu0 %v849
    %915 = vmatprep.subr.bf16.mxu0 %v852
    %916 = vmatpush1.bf16.msra.mxu0 %v851
    %917 = vmatprep.subr.bf16.mxu0 %v854
    %918 = vmatpush1.bf16.msra.mxu0 %v853
    %919 = vmatprep.subr.bf16.mxu0 %v856
    %920 = vmatpush1.bf16.msra.mxu0 %v855
    %921 = vmatprep.subr.bf16.mxu0 %v858
    %922 = vmatpush1.bf16.msra.mxu0 %v857
    %923 = vmatprep.subr.bf16.mxu0 %v860
    %924 = vmatpush1.bf16.msra.mxu0 %v859
    %925 = vmatprep.mubr.bf16.mxu0 %v700
    %926 = vmatmul.mubr.bf16.gmra.mrb[0].mxu0 %v699
    %v927 = vpop.f32.mrb[0].mxu0
    %v928 = vadd.f32 0.0, %v927
    %v929 = vpop.f32.mrb[0].mxu0
    %v930 = vadd.f32 0.0, %v929
    %v931 = vpop.f32.mrb[0].mxu0
    %v932 = vpop.f32.mrb[0].mxu0
    %933 = vdwg.mxu0
    %v934 = vld [vmem:[#allocation7 + $0x100] sm:$0xff]
    %v935 = vld [vmem:[#allocation7 + $0x108] sm:$0xff]
    %v936 = vld [vmem:[#allocation7 + $0x110] sm:$0xff]
    %v937 = vld [vmem:[#allocation7 + $0x118] sm:$0xff]
    %v938 = vld [vmem:[#allocation7 + $0x120] sm:$0xff]
    %v939 = vld [vmem:[#allocation7 + $0x128] sm:$0xff]
    %v940 = vld [vmem:[#allocation7 + $0x130] sm:$0xff]
    %v941 = vld [vmem:[#allocation7 + $0x138] sm:$0xff]
    %v942 = vld [vmem:[#allocation7 + $0x140] sm:$0xff]
    %v943 = vld [vmem:[#allocation7 + $0x148] sm:$0xff]
    %v944 = vld [vmem:[#allocation7 + $0x150] sm:$0xff]
    %v945 = vld [vmem:[#allocation7 + $0x158] sm:$0xff]
    %v946 = vld [vmem:[#allocation7 + $0x160] sm:$0xff]
    %v947 = vld [vmem:[#allocation7 + $0x168] sm:$0xff]
    %v948 = vld [vmem:[#allocation7 + $0x170] sm:$0xff]
    %v949 = vld [vmem:[#allocation7 + $0x178] sm:$0xff]
    %v950 = vld [vmem:[#allocation7 + $0x180] sm:$0xff]
    %v951 = vld [vmem:[#allocation7 + $0x188] sm:$0xff]
    %v952 = vld [vmem:[#allocation7 + $0x190] sm:$0xff]
    %v953 = vld [vmem:[#allocation7 + $0x198] sm:$0xff]
    %v954 = vld [vmem:[#allocation7 + $0x1a0] sm:$0xff]
    %v955 = vld [vmem:[#allocation7 + $0x1a8] sm:$0xff]
    %v956 = vld [vmem:[#allocation7 + $0x1b0] sm:$0xff]
    %v957 = vld [vmem:[#allocation7 + $0x1b8] sm:$0xff]
    %v958 = vld [vmem:[#allocation7 + $0x1c0] sm:$0xff]
    %v959 = vld [vmem:[#allocation7 + $0x1c8] sm:$0xff]
    %v960 = vld [vmem:[#allocation7 + $0x1d0] sm:$0xff]
    %v961 = vld [vmem:[#allocation7 + $0x1d8] sm:$0xff]
    %v962 = vld [vmem:[#allocation7 + $0x1e0] sm:$0xff]
    %v963 = vld [vmem:[#allocation7 + $0x1e8] sm:$0xff]
    %v964 = vld [vmem:[#allocation7 + $0x1f0] sm:$0xff]
    %v965 = vld [vmem:[#allocation7 + $0x1f8] sm:$0xff]
    %v968 = vrot.slane %v699, 4
    %v969 = vrot.slane %v700, 4
    %v1004 = vunpack.c.l.b16 %v934
    %v1005 = vunpack.c.h.b16 %v934
    %v1006 = vunpack.c.l.b16 %v935
    %v1007 = vunpack.c.h.b16 %v935
    %v1008 = vunpack.c.l.b16 %v936
    %v1009 = vunpack.c.h.b16 %v936
    %v1010 = vunpack.c.l.b16 %v937
    %v1011 = vunpack.c.h.b16 %v937
    %v1012 = vunpack.c.l.b16 %v938
    %v1013 = vunpack.c.h.b16 %v938
    %v1014 = vunpack.c.l.b16 %v939
    %v1015 = vunpack.c.h.b16 %v939
    %v1016 = vunpack.c.l.b16 %v940
    %v1017 = vunpack.c.h.b16 %v940
    %v1018 = vunpack.c.l.b16 %v941
    %v1019 = vunpack.c.h.b16 %v941
    %v1020 = vunpack.c.l.b16 %v942
    %v1021 = vunpack.c.h.b16 %v942
    %v1022 = vunpack.c.l.b16 %v943
    %v1023 = vunpack.c.h.b16 %v943
    %v1024 = vunpack.c.l.b16 %v944
    %v1025 = vunpack.c.h.b16 %v944
    %v1026 = vunpack.c.l.b16 %v945
    %v1027 = vunpack.c.h.b16 %v945
    %v1028 = vunpack.c.l.b16 %v946
    %v1029 = vunpack.c.h.b16 %v946
    %v1030 = vunpack.c.l.b16 %v947
    %v1031 = vunpack.c.h.b16 %v947
    %v1032 = vunpack.c.l.b16 %v948
    %v1033 = vunpack.c.h.b16 %v948
    %v1034 = vunpack.c.l.b16 %v949
    %v1035 = vunpack.c.h.b16 %v949
    %v1036 = vunpack.c.l.b16 %v950
    %v1037 = vunpack.c.h.b16 %v950
    %v1038 = vunpack.c.l.b16 %v951
    %v1039 = vunpack.c.h.b16 %v951
    %v1040 = vunpack.c.l.b16 %v952
    %v1041 = vunpack.c.h.b16 %v952
    %v1042 = vunpack.c.l.b16 %v953
    %v1043 = vunpack.c.h.b16 %v953
    %v1044 = vunpack.c.l.b16 %v954
    %v1045 = vunpack.c.h.b16 %v954
    %v1046 = vunpack.c.l.b16 %v955
    %v1047 = vunpack.c.h.b16 %v955
    %v1048 = vunpack.c.l.b16 %v956
    %v1049 = vunpack.c.h.b16 %v956
    %v1050 = vunpack.c.l.b16 %v957
    %v1051 = vunpack.c.h.b16 %v957
    %v1052 = vunpack.c.l.b16 %v958
    %v1053 = vunpack.c.h.b16 %v958
    %v1054 = vunpack.c.l.b16 %v959
    %v1055 = vunpack.c.h.b16 %v959
    %v1056 = vunpack.c.l.b16 %v960
    %v1057 = vunpack.c.h.b16 %v960
    %v1058 = vunpack.c.l.b16 %v961
    %v1059 = vunpack.c.h.b16 %v961
    %v1060 = vunpack.c.l.b16 %v962
    %v1061 = vunpack.c.h.b16 %v962
    %v1062 = vunpack.c.l.b16 %v963
    %v1063 = vunpack.c.h.b16 %v963
    %v1064 = vunpack.c.l.b16 %v964
    %v1065 = vunpack.c.h.b16 %v964
    %v1066 = vunpack.c.l.b16 %v965
    %v1067 = vunpack.c.h.b16 %v965
    %v1068 = vpack.c.b16 %v1006, %v1004
    %v1069 = vpack.c.b16 %v1007, %v1005
    %v1070 = vpack.c.b16 %v1010, %v1008
    %v1071 = vpack.c.b16 %v1011, %v1009
    %v1072 = vpack.c.b16 %v1014, %v1012
    %v1073 = vpack.c.b16 %v1015, %v1013
    %v1074 = vpack.c.b16 %v1018, %v1016
    %v1075 = vpack.c.b16 %v1019, %v1017
    %v1076 = vpack.c.b16 %v1022, %v1020
    %v1077 = vpack.c.b16 %v1023, %v1021
    %v1078 = vpack.c.b16 %v1026, %v1024
    %v1079 = vpack.c.b16 %v1027, %v1025
    %v1080 = vpack.c.b16 %v1030, %v1028
    %v1081 = vpack.c.b16 %v1031, %v1029
    %v1082 = vpack.c.b16 %v1034, %v1032
    %v1083 = vpack.c.b16 %v1035, %v1033
    %v1084 = vpack.c.b16 %v1038, %v1036
    %v1085 = vpack.c.b16 %v1039, %v1037
    %v1086 = vpack.c.b16 %v1042, %v1040
    %v1087 = vpack.c.b16 %v1043, %v1041
    %v1088 = vpack.c.b16 %v1046, %v1044
    %v1089 = vpack.c.b16 %v1047, %v1045
    %v1090 = vpack.c.b16 %v1050, %v1048
    %v1091 = vpack.c.b16 %v1051, %v1049
    %v1092 = vpack.c.b16 %v1054, %v1052
    %v1093 = vpack.c.b16 %v1055, %v1053
    %v1094 = vpack.c.b16 %v1058, %v1056
    %v1095 = vpack.c.b16 %v1059, %v1057
    %v1096 = vpack.c.b16 %v1062, %v1060
    %v1097 = vpack.c.b16 %v1063, %v1061
    %v1098 = vpack.c.b16 %v1066, %v1064
    %v1099 = vpack.c.b16 %v1067, %v1065
    %1132 = vmatprep.subr.bf16.mxu0 %v1069
    %1133 = vmatpush1.bf16.msra.mxu0 %v1068
    %1134 = vmatprep.subr.bf16.mxu0 %v1071
    %1135 = vmatpush1.bf16.msra.mxu0 %v1070
    %1136 = vmatprep.subr.bf16.mxu0 %v1073
    %1137 = vmatpush1.bf16.msra.mxu0 %v1072
    %1138 = vmatprep.subr.bf16.mxu0 %v1075
    %1139 = vmatpush1.bf16.msra.mxu0 %v1074
    %1140 = vmatprep.subr.bf16.mxu0 %v1077
    %1141 = vmatpush1.bf16.msra.mxu0 %v1076
    %1142 = vmatprep.subr.bf16.mxu0 %v1079
    %1143 = vmatpush1.bf16.msra.mxu0 %v1078
    %1144 = vmatprep.subr.bf16.mxu0 %v1081
    %1145 = vmatpush1.bf16.msra.mxu0 %v1080
    %1146 = vmatprep.subr.bf16.mxu0 %v1083
    %1147 = vmatpush1.bf16.msra.mxu0 %v1082
    %1148 = vmatprep.subr.bf16.mxu0 %v1085
    %1149 = vmatpush1.bf16.msra.mxu0 %v1084
    %1150 = vmatprep.subr.bf16.mxu0 %v1087
    %1151 = vmatpush1.bf16.msra.mxu0 %v1086
    %1152 = vmatprep.subr.bf16.mxu0 %v1089
    %1153 = vmatpush1.bf16.msra.mxu0 %v1088
    %1154 = vmatprep.subr.bf16.mxu0 %v1091
    %1155 = vmatpush1.bf16.msra.mxu0 %v1090
    %1156 = vmatprep.subr.bf16.mxu0 %v1093
    %1157 = vmatpush1.bf16.msra.mxu0 %v1092
    %1158 = vmatprep.subr.bf16.mxu0 %v1095
    %1159 = vmatpush1.bf16.msra.mxu0 %v1094
    %1160 = vmatprep.subr.bf16.mxu0 %v1097
    %1161 = vmatpush1.bf16.msra.mxu0 %v1096
    %1162 = vmatprep.subr.bf16.mxu0 %v1099
    %1163 = vmatpush1.bf16.msra.mxu0 %v1098
    %1164 = vmatprep.mubr.bf16.mxu0 %v969
    %1165 = vmatmul.mubr.bf16.gmra.mrb[0].mxu0 %v968
    %v1166 = vpop.f32.mrb[0].mxu0
    %v1167 = vadd.f32 0.0, %v1166
    %v1168 = vpop.f32.mrb[0].mxu0
    %v1169 = vadd.f32 0.0, %v1168
    %v1170 = vpop.f32.mrb[0].mxu0
    %v1171 = vpop.f32.mrb[0].mxu0
    %1172 = vdwg.mxu0
    %v1173 = vadd.f32 %v592, %v691
    %v1174 = vadd.f32 %v594, %v693
    %v1175 = vadd.f32 %v596, %v695
    %v1176 = vadd.f32 %v598, %v697
    %v1177 = vadd.f32 %v1173, %v635
    %v1178 = vadd.f32 %v1174, %v637
    %v1179 = vadd.f32 %v1175, %v639
    %v1180 = vadd.f32 %v1176, %v641
    %v1181 = vadd.f32 %v1177, %v928
    %v1182 = vadd.f32 %v1178, %v930
    %v1183 = vadd.f32 %v1179, %v1167
    %v1184 = vadd.f32 %v1180, %v1169
    %v1185 = vmax.f32 %v1181, 0.0
    %v1186 = vmax.f32 %v1182, 0.0
    %v1187 = vmax.f32 %v1183, 0.0
    %v1188 = vmax.f32 %v1184, 0.0
    %v1189 = vpack.c.bf16 %v1187, %v1185
    %v1190 = vpack.c.bf16 %v1188, %v1186
    %v1191 = vld [vmem:[%s4 + $0x4] sm:$0x3]
    %v1193 = vlaneseq
    %v1194 = vshrl.u32 %v1193, 7
    %v1195 = vsub.s32 0, %v1194
    %v1196 = vrot.slane %v1191, %v1195
    %v1197 = vlaneseq
    %v1198 = vshrl.u32 %v1197, 7
    %v1199 = vsub.s32 1, %v1198
    %v1200 = vrot.slane %v1191, %v1199
    %v1235 = vunpack.c.l.b16 %v141
    %v1236 = vunpack.c.h.b16 %v141
    %v1237 = vunpack.c.l.b16 %v142
    %v1238 = vunpack.c.h.b16 %v142
    %v1239 = vunpack.c.l.b16 %v143
    %v1240 = vunpack.c.h.b16 %v143
    %v1241 = vunpack.c.l.b16 %v144
    %v1242 = vunpack.c.h.b16 %v144
    %v1243 = vunpack.c.l.b16 %v145
    %v1244 = vunpack.c.h.b16 %v145
    %v1245 = vunpack.c.l.b16 %v146
    %v1246 = vunpack.c.h.b16 %v146
    %v1247 = vunpack.c.l.b16 %v147
    %v1248 = vunpack.c.h.b16 %v147
    %v1249 = vunpack.c.l.b16 %v148
    %v1250 = vunpack.c.h.b16 %v148
    %v1251 = vunpack.c.l.b16 %v149
    %v1252 = vunpack.c.h.b16 %v149
    %v1253 = vunpack.c.l.b16 %v150
    %v1254 = vunpack.c.h.b16 %v150
    %v1255 = vunpack.c.l.b16 %v151
    %v1256 = vunpack.c.h.b16 %v151
    %v1257 = vunpack.c.l.b16 %v152
    %v1258 = vunpack.c.h.b16 %v152
    %v1259 = vunpack.c.l.b16 %v153
    %v1260 = vunpack.c.h.b16 %v153
    %v1261 = vunpack.c.l.b16 %v154
    %v1262 = vunpack.c.h.b16 %v154
    %v1263 = vunpack.c.l.b16 %v155
    %v1264 = vunpack.c.h.b16 %v155
    %v1265 = vunpack.c.l.b16 %v156
    %v1266 = vunpack.c.h.b16 %v156
    %v1267 = vunpack.c.l.b16 %v157
    %v1268 = vunpack.c.h.b16 %v157
    %v1269 = vunpack.c.l.b16 %v158
    %v1270 = vunpack.c.h.b16 %v158
    %v1271 = vunpack.c.l.b16 %v159
    %v1272 = vunpack.c.h.b16 %v159
    %v1273 = vunpack.c.l.b16 %v160
    %v1274 = vunpack.c.h.b16 %v160
    %v1275 = vunpack.c.l.b16 %v161
    %v1276 = vunpack.c.h.b16 %v161
    %v1277 = vunpack.c.l.b16 %v162
    %v1278 = vunpack.c.h.b16 %v162
    %v1279 = vunpack.c.l.b16 %v163
    %v1280 = vunpack.c.h.b16 %v163
    %v1281 = vunpack.c.l.b16 %v164
    %v1282 = vunpack.c.h.b16 %v164
    %v1283 = vunpack.c.l.b16 %v165
    %v1284 = vunpack.c.h.b16 %v165
    %v1285 = vunpack.c.l.b16 %v166
    %v1286 = vunpack.c.h.b16 %v166
    %v1287 = vunpack.c.l.b16 %v167
    %v1288 = vunpack.c.h.b16 %v167
    %v1289 = vunpack.c.l.b16 %v168
    %v1290 = vunpack.c.h.b16 %v168
    %v1291 = vunpack.c.l.b16 %v169
    %v1292 = vunpack.c.h.b16 %v169
    %v1293 = vunpack.c.l.b16 %v170
    %v1294 = vunpack.c.h.b16 %v170
    %v1295 = vunpack.c.l.b16 %v171
    %v1296 = vunpack.c.h.b16 %v171
    %v1297 = vunpack.c.l.b16 %v172
    %v1298 = vunpack.c.h.b16 %v172
    %v1299 = vpack.c.b16 %v1237, %v1235
    %v1300 = vpack.c.b16 %v1238, %v1236
    %v1301 = vpack.c.b16 %v1241, %v1239
    %v1302 = vpack.c.b16 %v1242, %v1240
    %v1303 = vpack.c.b16 %v1245, %v1243
    %v1304 = vpack.c.b16 %v1246, %v1244
    %v1305 = vpack.c.b16 %v1249, %v1247
    %v1306 = vpack.c.b16 %v1250, %v1248
    %v1307 = vpack.c.b16 %v1253, %v1251
    %v1308 = vpack.c.b16 %v1254, %v1252
    %v1309 = vpack.c.b16 %v1257, %v1255
    %v1310 = vpack.c.b16 %v1258, %v1256
    %v1311 = vpack.c.b16 %v1261, %v1259
    %v1312 = vpack.c.b16 %v1262, %v1260
    %v1313 = vpack.c.b16 %v1265, %v1263
    %v1314 = vpack.c.b16 %v1266, %v1264
    %v1315 = vpack.c.b16 %v1269, %v1267
    %v1316 = vpack.c.b16 %v1270, %v1268
    %v1317 = vpack.c.b16 %v1273, %v1271
    %v1318 = vpack.c.b16 %v1274, %v1272
    %v1319 = vpack.c.b16 %v1277, %v1275
    %v1320 = vpack.c.b16 %v1278, %v1276
    %v1321 = vpack.c.b16 %v1281, %v1279
    %v1322 = vpack.c.b16 %v1282, %v1280
    %v1323 = vpack.c.b16 %v1285, %v1283
    %v1324 = vpack.c.b16 %v1286, %v1284
    %v1325 = vpack.c.b16 %v1289, %v1287
    %v1326 = vpack.c.b16 %v1290, %v1288
    %v1327 = vpack.c.b16 %v1293, %v1291
    %v1328 = vpack.c.b16 %v1294, %v1292
    %v1329 = vpack.c.b16 %v1297, %v1295
    %v1330 = vpack.c.b16 %v1298, %v1296
    %1363 = vmatprep.subr.bf16.mxu0 %v1300
    %1364 = vmatpush1.bf16.msra.mxu0 %v1299
    %1365 = vmatprep.subr.bf16.mxu0 %v1302
    %1366 = vmatpush1.bf16.msra.mxu0 %v1301
    %1367 = vmatprep.subr.bf16.mxu0 %v1304
    %1368 = vmatpush1.bf16.msra.mxu0 %v1303
    %1369 = vmatprep.subr.bf16.mxu0 %v1306
    %1370 = vmatpush1.bf16.msra.mxu0 %v1305
    %1371 = vmatprep.subr.bf16.mxu0 %v1308
    %1372 = vmatpush1.bf16.msra.mxu0 %v1307
    %1373 = vmatprep.subr.bf16.mxu0 %v1310
    %1374 = vmatpush1.bf16.msra.mxu0 %v1309
    %1375 = vmatprep.subr.bf16.mxu0 %v1312
    %1376 = vmatpush1.bf16.msra.mxu0 %v1311
    %1377 = vmatprep.subr.bf16.mxu0 %v1314
    %1378 = vmatpush1.bf16.msra.mxu0 %v1313
    %1379 = vmatprep.subr.bf16.mxu0 %v1316
    %1380 = vmatpush1.bf16.msra.mxu0 %v1315
    %1381 = vmatprep.subr.bf16.mxu0 %v1318
    %1382 = vmatpush1.bf16.msra.mxu0 %v1317
    %1383 = vmatprep.subr.bf16.mxu0 %v1320
    %1384 = vmatpush1.bf16.msra.mxu0 %v1319
    %1385 = vmatprep.subr.bf16.mxu0 %v1322
    %1386 = vmatpush1.bf16.msra.mxu0 %v1321
    %1387 = vmatprep.subr.bf16.mxu0 %v1324
    %1388 = vmatpush1.bf16.msra.mxu0 %v1323
    %1389 = vmatprep.subr.bf16.mxu0 %v1326
    %1390 = vmatpush1.bf16.msra.mxu0 %v1325
    %1391 = vmatprep.subr.bf16.mxu0 %v1328
    %1392 = vmatpush1.bf16.msra.mxu0 %v1327
    %1393 = vmatprep.subr.bf16.mxu0 %v1330
    %1394 = vmatpush1.bf16.msra.mxu0 %v1329
    %1395 = vmatprep.mubr.bf16.mxu0 %v1190
    %1396 = vmatmul.mubr.bf16.gmra.mrb[0].mxu0 %v1189
    %v1397 = vpop.f32.mrb[0].mxu0
    %v1398 = vadd.f32 %v1196, %v1397
    %v1399 = vpop.f32.mrb[0].mxu0
    %v1400 = vadd.f32 %v1200, %v1399
    %v1401 = vpop.f32.mrb[0].mxu0
    %v1402 = vadd.f32 %v1196, %v1401
    %v1403 = vpop.f32.mrb[0].mxu0
    %v1404 = vadd.f32 %v1200, %v1403
    %1405 = vdwg.mxu0
    %v1406 = vpack.c.bf16 %v1402, %v1398
    %v1407 = vpack.c.bf16 %v1404, %v1400
    %v1408 = vld [vmem:[%s4 + $0x6] sm:$0x3]
    %v1410 = vlaneseq
    %v1411 = vshrl.u32 %v1410, 7
    %v1412 = vsub.s32 0, %v1411
    %v1413 = vrot.slane %v1408, %v1412
    %v1414 = vlaneseq
    %v1415 = vshrl.u32 %v1414, 7
    %v1416 = vsub.s32 1, %v1415
    %v1417 = vrot.slane %v1408, %v1416
    %v1452 = vunpack.c.l.b16 %v173
    %v1453 = vunpack.c.h.b16 %v173
    %v1454 = vunpack.c.l.b16 %v174
    %v1455 = vunpack.c.h.b16 %v174
    %v1456 = vunpack.c.l.b16 %v175
    %v1457 = vunpack.c.h.b16 %v175
    %v1458 = vunpack.c.l.b16 %v176
    %v1459 = vunpack.c.h.b16 %v176
    %v1460 = vunpack.c.l.b16 %v177
    %v1461 = vunpack.c.h.b16 %v177
    %v1462 = vunpack.c.l.b16 %v178
    %v1463 = vunpack.c.h.b16 %v178
    %v1464 = vunpack.c.l.b16 %v179
    %v1465 = vunpack.c.h.b16 %v179
    %v1466 = vunpack.c.l.b16 %v180
    %v1467 = vunpack.c.h.b16 %v180
    %v1468 = vunpack.c.l.b16 %v181
    %v1469 = vunpack.c.h.b16 %v181
    %v1470 = vunpack.c.l.b16 %v182
    %v1471 = vunpack.c.h.b16 %v182
    %v1472 = vunpack.c.l.b16 %v183
    %v1473 = vunpack.c.h.b16 %v183
    %v1474 = vunpack.c.l.b16 %v184
    %v1475 = vunpack.c.h.b16 %v184
    %v1476 = vunpack.c.l.b16 %v185
    %v1477 = vunpack.c.h.b16 %v185
    %v1478 = vunpack.c.l.b16 %v186
    %v1479 = vunpack.c.h.b16 %v186
    %v1480 = vunpack.c.l.b16 %v187
    %v1481 = vunpack.c.h.b16 %v187
    %v1482 = vunpack.c.l.b16 %v188
    %v1483 = vunpack.c.h.b16 %v188
    %v1484 = vunpack.c.l.b16 %v189
    %v1485 = vunpack.c.h.b16 %v189
    %v1486 = vunpack.c.l.b16 %v190
    %v1487 = vunpack.c.h.b16 %v190
    %v1488 = vunpack.c.l.b16 %v191
    %v1489 = vunpack.c.h.b16 %v191
    %v1490 = vunpack.c.l.b16 %v192
    %v1491 = vunpack.c.h.b16 %v192
    %v1492 = vunpack.c.l.b16 %v193
    %v1493 = vunpack.c.h.b16 %v193
    %v1494 = vunpack.c.l.b16 %v194
    %v1495 = vunpack.c.h.b16 %v194
    %v1496 = vunpack.c.l.b16 %v195
    %v1497 = vunpack.c.h.b16 %v195
    %v1498 = vunpack.c.l.b16 %v196
    %v1499 = vunpack.c.h.b16 %v196
    %v1500 = vunpack.c.l.b16 %v197
    %v1501 = vunpack.c.h.b16 %v197
    %v1502 = vunpack.c.l.b16 %v198
    %v1503 = vunpack.c.h.b16 %v198
    %v1504 = vunpack.c.l.b16 %v199
    %v1505 = vunpack.c.h.b16 %v199
    %v1506 = vunpack.c.l.b16 %v200
    %v1507 = vunpack.c.h.b16 %v200
    %v1508 = vunpack.c.l.b16 %v201
    %v1509 = vunpack.c.h.b16 %v201
    %v1510 = vunpack.c.l.b16 %v202
    %v1511 = vunpack.c.h.b16 %v202
    %v1512 = vunpack.c.l.b16 %v203
    %v1513 = vunpack.c.h.b16 %v203
    %v1514 = vunpack.c.l.b16 %v204
    %v1515 = vunpack.c.h.b16 %v204
    %v1516 = vpack.c.b16 %v1454, %v1452
    %v1517 = vpack.c.b16 %v1455, %v1453
    %v1518 = vpack.c.b16 %v1458, %v1456
    %v1519 = vpack.c.b16 %v1459, %v1457
    %v1520 = vpack.c.b16 %v1462, %v1460
    %v1521 = vpack.c.b16 %v1463, %v1461
    %v1522 = vpack.c.b16 %v1466, %v1464
    %v1523 = vpack.c.b16 %v1467, %v1465
    %v1524 = vpack.c.b16 %v1470, %v1468
    %v1525 = vpack.c.b16 %v1471, %v1469
    %v1526 = vpack.c.b16 %v1474, %v1472
    %v1527 = vpack.c.b16 %v1475, %v1473
    %v1528 = vpack.c.b16 %v1478, %v1476
    %v1529 = vpack.c.b16 %v1479, %v1477
    %v1530 = vpack.c.b16 %v1482, %v1480
    %v1531 = vpack.c.b16 %v1483, %v1481
    %v1532 = vpack.c.b16 %v1486, %v1484
    %v1533 = vpack.c.b16 %v1487, %v1485
    %v1534 = vpack.c.b16 %v1490, %v1488
    %v1535 = vpack.c.b16 %v1491, %v1489
    %v1536 = vpack.c.b16 %v1494, %v1492
    %v1537 = vpack.c.b16 %v1495, %v1493
    %v1538 = vpack.c.b16 %v1498, %v1496
    %v1539 = vpack.c.b16 %v1499, %v1497
    %v1540 = vpack.c.b16 %v1502, %v1500
    %v1541 = vpack.c.b16 %v1503, %v1501
    %v1542 = vpack.c.b16 %v1506, %v1504
    %v1543 = vpack.c.b16 %v1507, %v1505
    %v1544 = vpack.c.b16 %v1510, %v1508
    %v1545 = vpack.c.b16 %v1511, %v1509
    %v1546 = vpack.c.b16 %v1514, %v1512
    %v1547 = vpack.c.b16 %v1515, %v1513
    %1580 = vmatprep.subr.bf16.mxu0 %v1517
    %1581 = vmatpush1.bf16.msra.mxu0 %v1516
    %1582 = vmatprep.subr.bf16.mxu0 %v1519
    %1583 = vmatpush1.bf16.msra.mxu0 %v1518
    %1584 = vmatprep.subr.bf16.mxu0 %v1521
    %1585 = vmatpush1.bf16.msra.mxu0 %v1520
    %1586 = vmatprep.subr.bf16.mxu0 %v1523
    %1587 = vmatpush1.bf16.msra.mxu0 %v1522
    %1588 = vmatprep.subr.bf16.mxu0 %v1525
    %1589 = vmatpush1.bf16.msra.mxu0 %v1524
    %1590 = vmatprep.subr.bf16.mxu0 %v1527
    %1591 = vmatpush1.bf16.msra.mxu0 %v1526
    %1592 = vmatprep.subr.bf16.mxu0 %v1529
    %1593 = vmatpush1.bf16.msra.mxu0 %v1528
    %1594 = vmatprep.subr.bf16.mxu0 %v1531
    %1595 = vmatpush1.bf16.msra.mxu0 %v1530
    %1596 = vmatprep.subr.bf16.mxu0 %v1533
    %1597 = vmatpush1.bf16.msra.mxu0 %v1532
    %1598 = vmatprep.subr.bf16.mxu0 %v1535
    %1599 = vmatpush1.bf16.msra.mxu0 %v1534
    %1600 = vmatprep.subr.bf16.mxu0 %v1537
    %1601 = vmatpush1.bf16.msra.mxu0 %v1536
    %1602 = vmatprep.subr.bf16.mxu0 %v1539
    %1603 = vmatpush1.bf16.msra.mxu0 %v1538
    %1604 = vmatprep.subr.bf16.mxu0 %v1541
    %1605 = vmatpush1.bf16.msra.mxu0 %v1540
    %1606 = vmatprep.subr.bf16.mxu0 %v1543
    %1607 = vmatpush1.bf16.msra.mxu0 %v1542
    %1608 = vmatprep.subr.bf16.mxu0 %v1545
    %1609 = vmatpush1.bf16.msra.mxu0 %v1544
    %1610 = vmatprep.subr.bf16.mxu0 %v1547
    %1611 = vmatpush1.bf16.msra.mxu0 %v1546
    %1612 = vmatprep.mubr.bf16.mxu0 %v1407
    %1613 = vmatmul.mubr.bf16.gmra.mrb[0].mxu0 %v1406
    %v1614 = vpop.f32.mrb[0].mxu0
    %v1615 = vadd.f32 %v1413, %v1614
    %v1616 = vpop.f32.mrb[0].mxu0
    %v1617 = vadd.f32 %v1417, %v1616
    %v1618 = vpop.f32.mrb[0].mxu0
    %v1619 = vadd.f32 %v1413, %v1618
    %v1620 = vpop.f32.mrb[0].mxu0
    %v1621 = vadd.f32 %v1417, %v1620
    %1622 = vdwg.mxu0
    %v1623 = vadd.f32 %v1181, %v1615
    %v1624 = vadd.f32 %v1182, %v1617
    %v1625 = vadd.f32 %v1183, %v1619
    %v1626 = vadd.f32 %v1184, %v1621
    %1627 = vst [vmem:[#allocation10] sm:$0xff] %v1623
    %1628 = vst [vmem:[#allocation10 + $0x8] sm:$0xff] %v1624
    %1629 = vst [vmem:[#allocation10 + $0x10] sm:$0xff] %v1625
    %1630 = vst [vmem:[#allocation10 + $0x18] sm:$0xff] %v1626
    // Predicated region
    $region38: #{tpu_custom_call.1} parent=1 // pred_check
      _
    $region39: #{tpu_custom_call.1} parent=1 // pred_check_branch
      %1632 = sbr.rel (0) target = $region41
    $region40: #{tpu_custom_call.1} parent=1 // pred_region
      %s1634 = ssub.s32 512, 512
      %1635 = vsyncadd [#allocation4], %s1634
      %s1636 = sshll.u32 [#allocation10], 4
      %s1637 = int_to_ptr.vmem [resolvable:$true] %s1636
      %1642 = dma.vmem_to_hbm [thread:$0]  %s1637, 512, %s5, [#allocation4], 256, 256, 16
    $region41: #{tpu_custom_call.1} parent=1 // pred_fallthru
      _
    // Predicated region
    $region42: #{tpu_custom_call.1} parent=1 // pred_check
      _
    $region43: #{tpu_custom_call.1} parent=1 // pred_check_branch
      %1644 = sbr.rel (0) target = $region45
    $region44: #{tpu_custom_call.1} parent=1 // pred_region
      %1645 = dma.done [#allocation4], 512
    $region45: #{tpu_custom_call.1} parent=1 // pred_fallthru
      _
    %1646 = vsyncpa [#allocation3], 1
    %1647 = vsyncpa [#allocation6], 1
    %1648 = vsyncpa [#allocation9], 1
    %1649 = vsyncpa [#allocation4], 1

</llo_original>
